<compile_context>
chip_gen: v6e
topology: v6e:2x2x1
jax: 0.10.0
libtpu: 0.0.40
codegen_flags: <defaults>
</compile_context>

<pallas_src>
import functools

import jax
import jax.numpy as jnp
import numpy as np
from jax.experimental import pallas as pl
from jax.experimental.pallas import tpu as pltpu


def _pair(v):
    if isinstance(v, (list, tuple)):
        return tuple(v)
    return (v, v)


def _round_up(v, m):
    return (v + m - 1) // m * m


def _conv_out_hw(H, W, kernel_size, stride, padding, dilation):
    kh, kw = kernel_size
    sh, sw = stride
    ph, pw = padding
    dh, dw = dilation
    out_H = (H + 2 * ph - dh * (kh - 1) - 1) // sh + 1
    out_W = (W + 2 * pw - dw * (kw - 1) - 1) // sw + 1
    return out_H, out_W


def _extract_patches(x, kernel_size, stride, padding, dilation):
    """kp patches, each (N, C, out_H, out_W), in F.unfold (row-major kernel) order."""
    kh, kw = kernel_size
    sh, sw = stride
    ph, pw = padding
    dh, dw = dilation
    out_H, out_W = _conv_out_hw(x.shape[2], x.shape[3], kernel_size, stride, padding, dilation)
    xp = jnp.pad(x, ((0, 0), (0, 0), (ph, ph), (pw, pw)))
    patches = []
    for i in range(kh):
        for j in range(kw):
            hs, ws = i * dh, j * dw
            patches.append(xp[:, :, hs:hs + (out_H - 1) * sh + 1:sh,
                                     ws:ws + (out_W - 1) * sw + 1:sw])
    return patches, out_H, out_W


def _vmem_capacity_bytes():
    """Generation-aware per-core VMEM capacity (best effort, safe fallbacks)."""
    try:
        info = pltpu.get_tpu_info()
        cap = getattr(info, "vmem_capacity_bytes", None)
        if cap:
            return int(cap)
    except Exception:
        pass
    try:
        kind = jax.devices()[0].device_kind.lower()
    except Exception:
        kind = ""
    if "v7" in kind:
        return 64 << 20          # v7x: 64 MiB per TensorCore
    return 128 << 20             # v5e / v6e: 128 MiB


def _choose_l_tile(per_col_bytes, l128, budget_bytes, max_tile=4096):
    """Largest 128-multiple tile that (a) divides l128 and (b) fits the VMEM budget."""
    n_blocks = l128 // 128
    best = 128
    for d in range(1, n_blocks + 1):
        if n_blocks % d:
            continue
        lt = 128 * d
        if lt > max_tile:
            break
        if per_col_bytes * lt <= budget_bytes:
            best = lt
    return best


def _conv25d_kernel(fx_ref, x_ref, d_ref, w_ref, o_ref, *, kp, c_pad, pixel_size):
    """One (L-tile, batch) block: three depth masks via boolean select + one fused MXU dot.

    fx_ref : SMEM (N,)                      scalar-prefetched intrinsic fx
    x_ref  : VMEM (1, kp*C_pad, LT)  bf16   im2col of x, K ordered (position, channel)
    d_ref  : VMEM (1, kp, LT)        f32    im2col of depth (NOT replicated over C)
    w_ref  : VMEM (out_C_pad, 3*kp*C_pad)   bf16 fused weights, K ordered (target, pos, chan)
    o_ref  : VMEM (1, out_C_pad, LT)        output tile
    """
    b = pl.program_id(1)                       # grid = (L-tiles, N)
    fx = fx_ref[b]

    d = d_ref[0]                               # (kp, LT) f32
    center = d[kp // 2:kp // 2 + 1, :]         # (1, LT)
    grid_range = (pixel_size * center) / fx    # same association as the reference
    half = grid_range / 2

    lt = d.shape[-1]
    x3 = x_ref[0].reshape(kp, c_pad, lt)       # c_pad % 8 == 0 -> relayout-free split
    zero = jnp.zeros((), x3.dtype)

    # Build the fused K = 3*kp*C_pad operand: one vsel per (target, element); the (kp,1,LT)
    # mask broadcasts over the contiguous C sublane block (no jnp.tile, no cast, no mul).
    parts = []
    for tgt in (center + grid_range, center, center - grid_range):
        m = jnp.abs(d - tgt) <= half                                   # (kp, LT) bool, f32 math
        parts.append(jnp.where(m[:, None, :], x3, zero))               # (kp, C_pad, LT)
    xk = jnp.concatenate(parts, axis=0).reshape(3 * kp * c_pad, lt)    # (3*kp*C_pad, LT)

    acc = jnp.dot(w_ref[...], xk, preferred_element_type=jnp.float32)  # (out_C_pad, LT) f32
    o_ref[0] = acc.astype(o_ref.dtype)


def conv_2_5d_depth_pallas(x, depth, camera_params, w0, w1, w2,
                           stride=1, padding=0, dilation=1, pixel_size=1,
                           bias=None, compute_dtype=jnp.bfloat16, out_dtype=jnp.float32):
    stride, padding, dilation = _pair(stride), _pair(padding), _pair(dilation)
    N, C, H, W = x.shape
    out_C, _, kh, kw = w0.shape
    kernel_size = (kh, kw)
    kp = kh * kw
    assert kp % 2 == 1

    out_H, out_W = _conv_out_hw(H, W, kernel_size, stride, padding, dilation)
    L = out_H * out_W
    L128 = _round_up(L, 128)             # pad only to 128, folded into the unfold below

    c_pad = _round_up(C, 8)
    oc_pad = _round_up(out_C, 8)
    k_unf = kp * c_pad
    k_fused = 3 * k_unf

    fx = camera_params["intrinsic"]["fx"].reshape(N).astype(jnp.float32)

    # ---- im2col (channel / L padding folded per-patch so XLA fuses it into one write) ----
    x_patches, _, _ = _extract_patches(x.astype(compute_dtype), kernel_size,
                                       stride, padding, dilation)
    x_cols = [jnp.pad(p.reshape(N, C, L), ((0, 0), (0, c_pad - C), (0, L128 - L)))
              for p in x_patches]
    x_flat = jnp.stack(x_cols, axis=1).reshape(N, k_unf, L128)          # (N, kp*C_pad, L128)

    d_patches, _, _ = _extract_patches(depth.astype(jnp.float32), kernel_size,
                                       stride, padding, dilation)
    d_cols = [jnp.pad(p.reshape(N, L), ((0, 0), (0, L128 - L))) for p in d_patches]
    d_flat = jnp.stack(d_cols, axis=1)                                  # (N, kp, L128)

    # Fused weights: (out_C, 3, kp, C) -> (oc_pad, 3*kp*c_pad), K ordered (target, pos, chan).
    ws = jnp.stack([w0, w1, w2], axis=0).astype(jnp.float32).reshape(3, out_C, C, kp)
    ws = jnp.transpose(ws, (1, 0, 3, 2))                                # (out_C, 3, kp, C)
    ws = jnp.pad(ws, ((0, oc_pad - out_C), (0, 0), (0, 0), (0, c_pad - C)))
    w_fused = ws.reshape(oc_pad, k_fused).astype(compute_dtype)

    # ---- generation-aware VMEM budget & L tile -------------------------------------------
    cap = _vmem_capacity_bytes()
    limit_ceiling = (48 << 20) if cap <= (64 << 20) else (100 << 20)
    it = jnp.dtype(compute_dtype).itemsize
    oit = jnp.dtype(out_dtype).itemsize
    resident_w = 2 * oc_pad * k_fused * it        # budget conservatively (as if double-buffered)
    per_col = (2 * k_unf * it                     # x stream (double-buffered)
               + 2 * kp * 4                       # depth stream
               + 2 * oc_pad * oit + oc_pad * 4    # output stream + f32 accumulator
               + 2 * k_fused * it)                # in-kernel fused masked operand + slack
    budget = max(limit_ceiling - resident_w - (8 << 20), per_col * 128)
    l_tile = _choose_l_tile(per_col, L128, budget)
    vmem_limit = int(min(limit_ceiling,
                         max(32 << 20, resident_w + per_col * l_tile + (8 << 20))))

    grid = (L128 // l_tile, N)                    # high-trip-count axis first (megacore-friendly)
    kernel = functools.partial(_conv25d_kernel, kp=kp, c_pad=c_pad,
                               pixel_size=float(pixel_size))

    def _run(single_buffer_weights):
        w_kwargs = {}
        if single_buffer_weights:
            # Constant index_map -> no need to double-buffer the resident weights.
            w_kwargs = dict(pipeline_mode=pl.Buffered(1))
        w_spec = pl.BlockSpec((oc_pad, k_fused), lambda l, b, fxr: (0, 0), **w_kwargs)
        return pl.pallas_call(
            kernel,
            out_shape=jax.ShapeDtypeStruct((N, oc_pad, L128), out_dtype),
            grid_spec=pltpu.PrefetchScalarGridSpec(
                num_scalar_prefetch=1,
                grid=grid,
                in_specs=[
                    pl.BlockSpec((1, k_unf, l_tile), lambda l, b, fxr: (b, 0, l)),
                    pl.BlockSpec((1, kp, l_tile), lambda l, b, fxr: (b, 0, l)),
                    w_spec,
                ],
                out_specs=pl.BlockSpec((1, oc_pad, l_tile), lambda l, b, fxr: (b, 0, l)),
            ),
            compiler_params=pltpu.CompilerParams(
                dimension_semantics=("parallel", "parallel"),
                vmem_limit_bytes=vmem_limit,
            ),
        )(fx, x_flat, d_flat, w_fused)

    try:
        out = _run(True)
    except Exception:
        # Installed JAX rejected pipeline_mode=pl.Buffered(1); fall back to the default spec.
        out = _run(False)

    out = out[:, :out_C, :L].reshape(N, out_C, out_H, out_W)
    if bias is not None:
        out = out + bias.reshape(1, -1, 1, 1).astype(out.dtype)
    return out


def conv_2_5d_depth_reference(x, depth, camera_params, w0, w1, w2,
                              stride=1, padding=0, dilation=1, pixel_size=1):
    """Pure-JAX (f32) mirror of the PyTorch forward, for correctness checking."""
    stride, padding, dilation = _pair(stride), _pair(padding), _pair(dilation)
    N, C, H, W = x.shape
    out_C, _, kh, kw = w0.shape
    kp = kh * kw
    fx = camera_params["intrinsic"]["fx"].reshape(N, 1, 1).astype(jnp.float32)

    x_patches, out_H, out_W = _extract_patches(x.astype(jnp.float32), (kh, kw),
                                               stride, padding, dilation)
    L = out_H * out_W
    x_col = jnp.stack([p.reshape(N, C, L) for p in x_patches], axis=2)   # (N, C, kp, L)
    d_patches, _, _ = _extract_patches(depth.astype(jnp.float32), (kh, kw),
                                       stride, padding, dilation)
    d_col = jnp.stack([p.reshape(N, L) for p in d_patches], axis=1)      # (N, kp, L)

    center = d_col[:, kp // 2:kp // 2 + 1, :]                            # (N, 1, L)
    grid_range = pixel_size * center / fx
    half = grid_range / 2
    m0 = (jnp.abs(d_col - (center + grid_range)) <= half).astype(jnp.float32)[:, None]
    m1 = (jnp.abs(d_col - center) <= half).astype(jnp.float32)[:, None]
    m2 = (jnp.abs(d_col - (center - grid_range)) <= half).astype(jnp.float32)[:, None]

    out = jnp.matmul(w0.reshape(out_C, -1), (x_col * m0).reshape(N, C * kp, L))
    out = out + jnp.matmul(w1.reshape(out_C, -1), (x_col * m1).reshape(N, C * kp, L))
    out = out + jnp.matmul(w2.reshape(out_C, -1), (x_col * m2).reshape(N, C * kp, L))
    return out.reshape(N, out_C, out_H, out_W)


if __name__ == "__main__":
    key = jax.random.PRNGKey(0)
    k_x, k_d, k_w0, k_w1, k_w2 = jax.random.split(key, 5)

    # Small shapes consistent with the module: NCHW input + single-channel depth.
    N, C, H, W = 2, 4, 16, 16
    out_C, ksize, pad = 8, 3, 1

    x = jax.random.normal(k_x, (N, C, H, W), jnp.float32)
    depth = jax.random.uniform(k_d, (N, 1, H, W), jnp.float32, minval=1.0, maxval=5.0)
    camera_params = {"intrinsic": {"fx": jnp.array([500.0, 520.0], jnp.float32)}}

    # Module declares weight_{0,1,2} of shape (out_C, C, kh, kw).
    w0 = 0.1 * jax.random.normal(k_w0, (out_C, C, ksize, ksize), jnp.float32)
    w1 = 0.1 * jax.random.normal(k_w1, (out_C, C, ksize, ksize), jnp.float32)
    w2 = 0.1 * jax.random.normal(k_w2, (out_C, C, ksize, ksize), jnp.float32)

    out = conv_2_5d_depth_pallas(x, depth, camera_params, w0, w1, w2,
                                 stride=1, padding=pad, dilation=1, pixel_size=1)
    out = jax.block_until_ready(out)

    ref = conv_2_5d_depth_reference(x, depth, camera_params, w0, w1, w2,
                                    stride=1, padding=pad, dilation=1, pixel_size=1)
    np.testing.assert_allclose(np.asarray(out), np.asarray(ref), rtol=2e-2, atol=2e-2)

    print("KERNEL_OK")
</pallas_src>

<mosaic_0001>
module attributes {stable_mosaic.version = 11 : i64} {
  func.func @_conv25d_kernel(%arg0: i32, %arg1: i32, %arg2: memref<2xf32, #tpu.memory_space<smem>>, %arg3: memref<1x72x256xbf16, #tpu.memory_space<vmem>>, %arg4: memref<1x9x256xf32, #tpu.memory_space<vmem>>, %arg5: memref<8x216xbf16, #tpu.memory_space<vmem>>, %arg6: memref<1x8x256xf32, #tpu.memory_space<vmem>>) attributes {dimension_semantics = [#tpu.dimension_semantics<parallel>, #tpu.dimension_semantics<parallel>], iteration_bounds = array<i64: 1, 2>, scalar_prefetch = 1 : i64, scratch_operands = 0 : i64, tpu.core_type = #tpu.core_type<tc>, window_params = [{transform_indices = @transform_0, window_bounds = array<i64: 1, 72, 256>}, {transform_indices = @transform_1, window_bounds = array<i64: 1, 9, 256>}, {pipeline_mode = #tpu.pipeline_mode<synchronous>, transform_indices = @transform_2, window_bounds = array<i64: 8, 216>}, {transform_indices = @transform_3, window_bounds = array<i64: 1, 8, 256>}]} {
    %0 = arith.index_cast %arg1 : i32 to index
    %1 = memref.load %arg2[%0] : memref<2xf32, #tpu.memory_space<smem>>
    %c0 = arith.constant 0 : index
    %c0_0 = arith.constant 0 : index
    %c0_1 = arith.constant 0 : index
    %2 = vector.load %arg4[%c0, %c0_0, %c0_1] : memref<1x9x256xf32, #tpu.memory_space<vmem>>, vector<1x9x256xf32>
    %3 = vector.shape_cast %2 : vector<1x9x256xf32> to vector<9x256xf32>
    %4 = vector.extract_strided_slice %3 {offsets = [4, 0], sizes = [1, 256], strides = [1, 1]} : vector<9x256xf32> to vector<1x256xf32>
    %cst = arith.constant 1.000000e+00 : f32
    %5 = vector.broadcast %cst : f32 to vector<1x256xf32>
    %6 = arith.mulf %5, %4 : vector<1x256xf32>
    %7 = vector.broadcast %1 : f32 to vector<1x256xf32>
    %8 = arith.divf %6, %7 : vector<1x256xf32>
    %cst_2 = arith.constant 2.000000e+00 : f32
    %9 = vector.broadcast %cst_2 : f32 to vector<1x256xf32>
    %10 = arith.divf %8, %9 : vector<1x256xf32>
    %c0_3 = arith.constant 0 : index
    %c0_4 = arith.constant 0 : index
    %c0_5 = arith.constant 0 : index
    %11 = vector.load %arg3[%c0_3, %c0_4, %c0_5] : memref<1x72x256xbf16, #tpu.memory_space<vmem>>, vector<1x72x256xbf16>
    %12 = vector.shape_cast %11 : vector<1x72x256xbf16> to vector<72x256xbf16>
    %13 = vector.shape_cast %12 : vector<72x256xbf16> to vector<9x8x256xbf16>
    %14 = arith.addf %4, %8 : vector<1x256xf32>
    %15 = arith.subf %4, %8 : vector<1x256xf32>
    %16 = vector.broadcast %14 : vector<1x256xf32> to vector<9x256xf32>
    %17 = arith.subf %3, %16 : vector<9x256xf32>
    %18 = math.absf %17 : vector<9x256xf32>
    %19 = vector.broadcast %10 : vector<1x256xf32> to vector<9x256xf32>
    %20 = arith.cmpf ole, %18, %19 : vector<9x256xf32>
    %21 = vector.shape_cast %20 : vector<9x256xi1> to vector<9x1x256xi1>
    %cst_6 = arith.constant 0.000000e+00 : bf16
    %22 = vector.shape_cast %21 : vector<9x1x256xi1> to vector<9x1x256xi1>
    %23 = vector.broadcast %22 : vector<9x1x256xi1> to vector<9x8x256xi1>
    %24 = vector.broadcast %cst_6 : bf16 to vector<9x8x256xbf16>
    %25 = arith.select %23, %13, %24 : vector<9x8x256xi1>, vector<9x8x256xbf16>
    %26 = vector.broadcast %4 : vector<1x256xf32> to vector<9x256xf32>
    %27 = arith.subf %3, %26 : vector<9x256xf32>
    %28 = math.absf %27 : vector<9x256xf32>
    %29 = vector.broadcast %10 : vector<1x256xf32> to vector<9x256xf32>
    %30 = arith.cmpf ole, %28, %29 : vector<9x256xf32>
    %31 = vector.shape_cast %30 : vector<9x256xi1> to vector<9x1x256xi1>
    %cst_7 = arith.constant 0.000000e+00 : bf16
    %32 = vector.shape_cast %31 : vector<9x1x256xi1> to vector<9x1x256xi1>
    %33 = vector.broadcast %32 : vector<9x1x256xi1> to vector<9x8x256xi1>
    %34 = vector.broadcast %cst_7 : bf16 to vector<9x8x256xbf16>
    %35 = arith.select %33, %13, %34 : vector<9x8x256xi1>, vector<9x8x256xbf16>
    %36 = vector.broadcast %15 : vector<1x256xf32> to vector<9x256xf32>
    %37 = arith.subf %3, %36 : vector<9x256xf32>
    %38 = math.absf %37 : vector<9x256xf32>
    %39 = vector.broadcast %10 : vector<1x256xf32> to vector<9x256xf32>
    %40 = arith.cmpf ole, %38, %39 : vector<9x256xf32>
    %41 = vector.shape_cast %40 : vector<9x256xi1> to vector<9x1x256xi1>
    %cst_8 = arith.constant 0.000000e+00 : bf16
    %42 = vector.shape_cast %41 : vector<9x1x256xi1> to vector<9x1x256xi1>
    %43 = vector.broadcast %42 : vector<9x1x256xi1> to vector<9x8x256xi1>
    %44 = vector.broadcast %cst_8 : bf16 to vector<9x8x256xbf16>
    %45 = arith.select %43, %13, %44 : vector<9x8x256xi1>, vector<9x8x256xbf16>
    %46 = tpu.concatenate %25, %35, %45 in 0 : vector<9x8x256xbf16>, vector<9x8x256xbf16>, vector<9x8x256xbf16> -> vector<27x8x256xbf16>
    %47 = vector.shape_cast %46 : vector<27x8x256xbf16> to vector<216x256xbf16>
    %c0_9 = arith.constant 0 : index
    %c0_10 = arith.constant 0 : index
    %48 = vector.load %arg5[%c0_9, %c0_10] : memref<8x216xbf16, #tpu.memory_space<vmem>>, vector<8x216xbf16>
    %cst_11 = arith.constant dense<0.000000e+00> : vector<8x256xf32>
    %49 = tpu.matmul %48, %47, %cst_11 {dimension_numbers = #tpu.dot_dimension_numbers<[1], [0], [0], [1], [0, 0, 1, 1], [], []>} : vector<8x216xbf16>, vector<216x256xbf16>, vector<8x256xf32> -> vector<8x256xf32>
    %c0_12 = arith.constant 0 : index
    %c0_13 = arith.constant 0 : index
    %c0_14 = arith.constant 0 : index
    %50 = vector.load %arg6[%c0_12, %c0_13, %c0_14] : memref<1x8x256xf32, #tpu.memory_space<vmem>>, vector<1x8x256xf32>
    %51 = vector.shape_cast %50 : vector<1x8x256xf32> to vector<8x256xf32>
    %52 = vector.shape_cast %49 : vector<8x256xf32> to vector<1x8x256xf32>
    tpu.vector_store %arg6[%c0_12, %c0_13, %c0_14], %52 {strides = array<i32>} : memref<1x8x256xf32, #tpu.memory_space<vmem>>, vector<1x8x256xf32>,
    return
  }
  func.func @transform_0(%arg0: i32, %arg1: i32, %arg2: memref<2xf32, #tpu.memory_space<smem>>) -> (i32, i32, i32) {
    %c0_i32 = arith.constant 0 : i32
    %c0_i32_0 = arith.constant 0 : i32
    return %arg1, %c0_i32, %arg0 : i32, i32, i32
  }
  func.func @transform_1(%arg0: i32, %arg1: i32, %arg2: memref<2xf32, #tpu.memory_space<smem>>) -> (i32, i32, i32) {
    %c0_i32 = arith.constant 0 : i32
    %c0_i32_0 = arith.constant 0 : i32
    return %arg1, %c0_i32, %arg0 : i32, i32, i32
  }
  func.func @transform_2(%arg0: i32, %arg1: i32, %arg2: memref<2xf32, #tpu.memory_space<smem>>) -> (i32, i32) {
    %c0_i32 = arith.constant 0 : i32
    %c0_i32_0 = arith.constant 0 : i32
    %c0_i32_1 = arith.constant 0 : i32
    return %c0_i32, %c0_i32_0 : i32, i32
  }
  func.func @transform_3(%arg0: i32, %arg1: i32, %arg2: memref<2xf32, #tpu.memory_space<smem>>) -> (i32, i32, i32) {
    %c0_i32 = arith.constant 0 : i32
    %c0_i32_0 = arith.constant 0 : i32
    return %arg1, %c0_i32, %arg0 : i32, i32, i32
  }
}

module attributes {stable_mosaic.version = 11 : i64} {
  func.func @_conv25d_kernel(%arg0: i32, %arg1: i32, %arg2: memref<2xf32, #tpu.memory_space<smem>>, %arg3: memref<1x72x256xbf16, #tpu.memory_space<vmem>>, %arg4: memref<1x9x256xf32, #tpu.memory_space<vmem>>, %arg5: memref<8x216xbf16, #tpu.memory_space<vmem>>, %arg6: memref<1x8x256xf32, #tpu.memory_space<vmem>>) attributes {dimension_semantics = [#tpu.dimension_semantics<parallel>, #tpu.dimension_semantics<parallel>], iteration_bounds = array<i64: 1, 2>, scalar_prefetch = 1 : i64, scratch_operands = 0 : i64, tpu.core_type = #tpu.core_type<tc>, window_params = [{transform_indices = @transform_0, window_bounds = array<i64: 1, 72, 256>}, {transform_indices = @transform_1, window_bounds = array<i64: 1, 9, 256>}, {pipeline_mode = #tpu.pipeline_mode<synchronous>, transform_indices = @transform_2, window_bounds = array<i64: 8, 216>}, {transform_indices = @transform_3, window_bounds = array<i64: 1, 8, 256>}]} {
    %0 = arith.index_cast %arg1 : i32 to index
    %1 = memref.load %arg2[%0] : memref<2xf32, #tpu.memory_space<smem>>
    %c0 = arith.constant 0 : index
    %c0_0 = arith.constant 0 : index
    %c0_1 = arith.constant 0 : index
    %2 = vector.load %arg4[%c0, %c0_0, %c0_1] : memref<1x9x256xf32, #tpu.memory_space<vmem>>, vector<1x9x256xf32>
    %3 = vector.shape_cast %2 : vector<1x9x256xf32> to vector<9x256xf32>
    %4 = vector.extract_strided_slice %3 {offsets = [4, 0], sizes = [1, 256], strides = [1, 1]} : vector<9x256xf32> to vector<1x256xf32>
    %cst = arith.constant 1.000000e+00 : f32
    %5 = vector.broadcast %cst : f32 to vector<1x256xf32>
    %6 = arith.mulf %5, %4 : vector<1x256xf32>
    %7 = vector.broadcast %1 : f32 to vector<1x256xf32>
    %8 = arith.divf %6, %7 : vector<1x256xf32>
    %cst_2 = arith.constant 2.000000e+00 : f32
    %9 = vector.broadcast %cst_2 : f32 to vector<1x256xf32>
    %10 = arith.divf %8, %9 : vector<1x256xf32>
    %c0_3 = arith.constant 0 : index
    %c0_4 = arith.constant 0 : index
    %c0_5 = arith.constant 0 : index
    %11 = vector.load %arg3[%c0_3, %c0_4, %c0_5] : memref<1x72x256xbf16, #tpu.memory_space<vmem>>, vector<1x72x256xbf16>
    %12 = vector.shape_cast %11 : vector<1x72x256xbf16> to vector<72x256xbf16>
    %13 = vector.shape_cast %12 : vector<72x256xbf16> to vector<9x8x256xbf16>
    %14 = arith.addf %4, %8 : vector<1x256xf32>
    %15 = arith.subf %4, %8 : vector<1x256xf32>
    %16 = vector.broadcast %14 : vector<1x256xf32> to vector<9x256xf32>
    %17 = arith.subf %3, %16 : vector<9x256xf32>
    %18 = math.absf %17 : vector<9x256xf32>
    %19 = vector.broadcast %10 : vector<1x256xf32> to vector<9x256xf32>
    %20 = arith.cmpf ole, %18, %19 : vector<9x256xf32>
    %21 = vector.shape_cast %20 : vector<9x256xi1> to vector<9x1x256xi1>
    %cst_6 = arith.constant 0.000000e+00 : bf16
    %22 = vector.shape_cast %21 : vector<9x1x256xi1> to vector<9x1x256xi1>
    %23 = vector.broadcast %22 : vector<9x1x256xi1> to vector<9x8x256xi1>
    %24 = vector.broadcast %cst_6 : bf16 to vector<9x8x256xbf16>
    %25 = arith.select %23, %13, %24 : vector<9x8x256xi1>, vector<9x8x256xbf16>
    %26 = vector.broadcast %4 : vector<1x256xf32> to vector<9x256xf32>
    %27 = arith.subf %3, %26 : vector<9x256xf32>
    %28 = math.absf %27 : vector<9x256xf32>
    %29 = vector.broadcast %10 : vector<1x256xf32> to vector<9x256xf32>
    %30 = arith.cmpf ole, %28, %29 : vector<9x256xf32>
    %31 = vector.shape_cast %30 : vector<9x256xi1> to vector<9x1x256xi1>
    %cst_7 = arith.constant 0.000000e+00 : bf16
    %32 = vector.shape_cast %31 : vector<9x1x256xi1> to vector<9x1x256xi1>
    %33 = vector.broadcast %32 : vector<9x1x256xi1> to vector<9x8x256xi1>
    %34 = vector.broadcast %cst_7 : bf16 to vector<9x8x256xbf16>
    %35 = arith.select %33, %13, %34 : vector<9x8x256xi1>, vector<9x8x256xbf16>
    %36 = vector.broadcast %15 : vector<1x256xf32> to vector<9x256xf32>
    %37 = arith.subf %3, %36 : vector<9x256xf32>
    %38 = math.absf %37 : vector<9x256xf32>
    %39 = vector.broadcast %10 : vector<1x256xf32> to vector<9x256xf32>
    %40 = arith.cmpf ole, %38, %39 : vector<9x256xf32>
    %41 = vector.shape_cast %40 : vector<9x256xi1> to vector<9x1x256xi1>
    %cst_8 = arith.constant 0.000000e+00 : bf16
    %42 = vector.shape_cast %41 : vector<9x1x256xi1> to vector<9x1x256xi1>
    %43 = vector.broadcast %42 : vector<9x1x256xi1> to vector<9x8x256xi1>
    %44 = vector.broadcast %cst_8 : bf16 to vector<9x8x256xbf16>
    %45 = arith.select %43, %13, %44 : vector<9x8x256xi1>, vector<9x8x256xbf16>
    %46 = tpu.concatenate %25, %35, %45 in 0 : vector<9x8x256xbf16>, vector<9x8x256xbf16>, vector<9x8x256xbf16> -> vector<27x8x256xbf16>
    %47 = vector.shape_cast %46 : vector<27x8x256xbf16> to vector<216x256xbf16>
    %c0_9 = arith.constant 0 : index
    %c0_10 = arith.constant 0 : index
    %48 = vector.load %arg5[%c0_9, %c0_10] : memref<8x216xbf16, #tpu.memory_space<vmem>>, vector<8x216xbf16>
    %cst_11 = arith.constant dense<0.000000e+00> : vector<8x256xf32>
    %49 = tpu.matmul %48, %47, %cst_11 {dimension_numbers = #tpu.dot_dimension_numbers<[1], [0], [0], [1], [0, 0, 1, 1], [], []>} : vector<8x216xbf16>, vector<216x256xbf16>, vector<8x256xf32> -> vector<8x256xf32>
    %c0_12 = arith.constant 0 : index
    %c0_13 = arith.constant 0 : index
    %c0_14 = arith.constant 0 : index
    %50 = vector.load %arg6[%c0_12, %c0_13, %c0_14] : memref<1x8x256xf32, #tpu.memory_space<vmem>>, vector<1x8x256xf32>
    %51 = vector.shape_cast %50 : vector<1x8x256xf32> to vector<8x256xf32>
    %52 = vector.shape_cast %49 : vector<8x256xf32> to vector<1x8x256xf32>
    tpu.vector_store %arg6[%c0_12, %c0_13, %c0_14], %52 {strides = array<i32>} : memref<1x8x256xf32, #tpu.memory_space<vmem>>, vector<1x8x256xf32>,
    return
  }
  func.func @transform_0(%arg0: i32, %arg1: i32, %arg2: memref<2xf32, #tpu.memory_space<smem>>) -> (i32, i32, i32) {
    %c0_i32 = arith.constant 0 : i32
    %c0_i32_0 = arith.constant 0 : i32
    return %arg1, %c0_i32, %arg0 : i32, i32, i32
  }
  func.func @transform_1(%arg0: i32, %arg1: i32, %arg2: memref<2xf32, #tpu.memory_space<smem>>) -> (i32, i32, i32) {
    %c0_i32 = arith.constant 0 : i32
    %c0_i32_0 = arith.constant 0 : i32
    return %arg1, %c0_i32, %arg0 : i32, i32, i32
  }
  func.func @transform_2(%arg0: i32, %arg1: i32, %arg2: memref<2xf32, #tpu.memory_space<smem>>) -> (i32, i32) {
    %c0_i32 = arith.constant 0 : i32
    %c0_i32_0 = arith.constant 0 : i32
    %c0_i32_1 = arith.constant 0 : i32
    return %c0_i32, %c0_i32_0 : i32, i32
  }
  func.func @transform_3(%arg0: i32, %arg1: i32, %arg2: memref<2xf32, #tpu.memory_space<smem>>) -> (i32, i32, i32) {
    %c0_i32 = arith.constant 0 : i32
    %c0_i32_0 = arith.constant 0 : i32
    return %arg1, %c0_i32, %arg0 : i32, i32, i32
  }
}

</mosaic_0001>

<llo_original>
// kernel: tpu_custom_call.1
$region0: #{tpu_custom_call.1}
  #allocation0 [shape = 'u32[]', space=smem, size = 0x4, offset = 0x4, fixed_abs, tag = 'smem constant byte address 0x4 - core index']
  #allocation1 [shape = 'u32[144,128]{1,0:T(1,128)}', space=vmem, size = 0x12000, scoped, tag = 'internal scratch']
  #allocation2 [shape = 's32[1]{0}', space=sflag, size = 0x4, scoped, tag = 'scoped memory for tpu_custom_call.1']
  #allocation3 [shape = 'u8[512]{0}', space=smem, size = 0x200, scoped, tag = 'prefetched SMEM operand 0']
  %s0 = inlined_call_operand.vmem [shape: f32[2], index: 0, kind: input, shape index: {}]
  %s1 = inlined_call_operand.hbm [shape: bf16[2,72,256], index: 1, kind: input, shape index: {}]
  %s2 = inlined_call_operand.vmem [shape: f32[2,9,256], index: 2, kind: input, shape index: {}]
  %s3 = inlined_call_operand.vmem [shape: bf16[8,216], index: 3, kind: input, shape index: {}]
  %s4 = inlined_call_operand.hbm [shape: f32[2,8,256], index: 4, kind: output, shape index: {}]
  %s5 = sld [smem:[#allocation0]]
  $region49: #{tpu_custom_call.1} parent=0
    _
  %s7 = ssub.s32 1, %s5
  %s8 = scalar_select 0, %s7, %s5
  %s9 = sshll.u32 %s0, 4
  %s10 = int_to_ptr.vmem [resolvable:$true] %s9
  %12 = dma.vmem_to_smem %s10, 16, [#allocation3], [#allocation2]
  %13 = dma.done [#allocation2], 16
  %14 = sfence
  $region1: #{tpu_custom_call.1} parent=0
    #allocation4 [shape = 'u8[73728]{0}', space=vmem, size = 0x12000, scoped, tag = 'input window, operand 1']
    #allocation5 [shape = 's32[2]{0}', space=sflag, size = 0x8, scoped, tag = 'scoped memory for tpu_custom_call.1']
    #allocation6 [shape = 's32[2]{0}', space=sflag, size = 0x8, scoped, tag = 'scoped memory for tpu_custom_call.1']
    #allocation7 [shape = 'u8[16384]{0}', space=vmem, size = 0x4000, scoped, tag = 'output window, operand 0']
    %15 = vsyncpa [#allocation5], 0
    %s16 = scalar_lea.sflag [#allocation5], 1
    %17 = vsyncpa %s16, 0
    %18 = vsyncpa [#allocation6], 0
    %s19 = scalar_lea.sflag [#allocation6], 1
    %20 = vsyncpa %s19, 0
    loop: start=0, step=1, limit=4
    $region2: #{tpu_custom_call.1} parent=1 // loop_pre_header
      _
    $region3: #{tpu_custom_call.1} parent=1 // loop_header
      %s22 = sphi 0, %s26
      %p23 = scmp.ge.s32.totalorder %s22, 4
      %s29 = sphi 0, %s41
      %s30 = sphi 0, %s37
      %s31 = sphi 0, %s29
      %s32 = sphi 0, %s30
      %s33 = sphi 0, %s31
      %s34 = sphi 0, %s32
      %s46 = sphi 0, %s48
      %s49 = sphi 0, %s46
      %s50 = sphi 0, %s49
      %s66 = sphi 0, %s50
      %s74 = sphi 0, %s76
      %s77 = sphi 0, %s74
      %s78 = sphi 0, %s77
      %s94 = sphi 0, %s78
      %s98 = sphi 0, %s98
      %s100 = sphi 0, %s98
      %s101 = sphi 0, %s100
      %s115 = sphi 0, %s101
      %s123 = sphi 0, %s125
      %s126 = sphi 0, %s123
      %s127 = sphi 0, %s126
      %s143 = sphi 0, %s127
    $region4: #{tpu_custom_call.1} parent=1 // loop_header_branch
      %25 = sbr.rel (%p23) target = $region8
    $region5: #{tpu_custom_call.1} parent=1 // loop_body
      %s27 = ssub.s32 %s22, 1
      %s28 = ssub.s32 %s22, 2
      %s35 = sadd.s32 1, %s30
      %p36 = scmp.ge.s32.totalorder %s35, 2
      %s37 = scalar_select %p36, 0, %s35
      %s38 = sadd.s32 1, %s29
      %s39 = scalar_select %p36, %s38, %s29
      %p40 = scmp.ge.s32.totalorder %s39, 1
      %s41 = scalar_select %p40, 0, %s39
      %s42 = ssub.s32 %s30, %s37
      %s43 = ssub.s32 %s29, %s41
      %s44 = sor.u32 %s42, %s43
      %p45 = scmp.eq.s32.totalorder %s44, 0
      %s47 = sadd.s32 %s46, 1
      %s48 = scalar_select %p45, %s46, %s47
      %p51 = pneg %p45
      %p52 = scmp.eq.s32.totalorder %s22, 1
      %p53 = por %p51, %p52
      %p54 = scmp.ne.s32.totalorder %s46, %s49
      %p55 = scmp.eq.s32.totalorder %s22, 0
      %p56 = por %p54, %p55
      %p57 = scmp.ne.s32.totalorder %s46, %s49
      %p58 = scmp.eq.s32.totalorder %s27, 1
      %p59 = por %p57, %p58
      %p60 = scmp.ne.s32.totalorder %s49, %s50
      %p61 = scmp.eq.s32.totalorder %s27, 0
      %p62 = por %p60, %p61
      %p63 = scmp.ne.s32.totalorder %s49, %s50
      %p64 = scmp.eq.s32.totalorder %s28, 1
      %p65 = por %p63, %p64
      %p67 = scmp.ne.s32.totalorder %s50, %s66
      %p68 = scmp.eq.s32.totalorder %s28, 0
      %p69 = por %p67, %p68
      %s70 = ssub.s32 %s30, %s37
      %s71 = ssub.s32 %s29, %s41
      %s72 = sor.u32 %s70, %s71
      %p73 = scmp.eq.s32.totalorder %s72, 0
      %s75 = sadd.s32 %s74, 1
      %s76 = scalar_select %p73, %s74, %s75
      %p79 = pneg %p73
      %p80 = scmp.eq.s32.totalorder %s22, 1
      %p81 = por %p79, %p80
      %p82 = scmp.ne.s32.totalorder %s74, %s77
      %p83 = scmp.eq.s32.totalorder %s22, 0
      %p84 = por %p82, %p83
      %p85 = scmp.ne.s32.totalorder %s74, %s77
      %p86 = scmp.eq.s32.totalorder %s27, 1
      %p87 = por %p85, %p86
      %p88 = scmp.ne.s32.totalorder %s77, %s78
      %p89 = scmp.eq.s32.totalorder %s27, 0
      %p90 = por %p88, %p89
      %p91 = scmp.ne.s32.totalorder %s77, %s78
      %p92 = scmp.eq.s32.totalorder %s28, 1
      %p93 = por %p91, %p92
      %p95 = scmp.ne.s32.totalorder %s78, %s94
      %p96 = scmp.eq.s32.totalorder %s28, 0
      %p97 = por %p95, %p96
      %s99 = sadd.s32 %s98, 1
      %p102 = scmp.eq.s32.totalorder %s22, 1
      %p103 = scmp.ne.s32.totalorder %s98, %s100
      %p104 = scmp.eq.s32.totalorder %s22, 0
      %p105 = por %p103, %p104
      %p106 = scmp.ne.s32.totalorder %s98, %s100
      %p107 = scmp.eq.s32.totalorder %s27, 1
      %p108 = por %p106, %p107
      %p109 = scmp.ne.s32.totalorder %s100, %s101
      %p110 = scmp.eq.s32.totalorder %s27, 0
      %p111 = por %p109, %p110
      %p112 = scmp.ne.s32.totalorder %s100, %s101
      %p113 = scmp.eq.s32.totalorder %s28, 1
      %p114 = por %p112, %p113
      %p116 = scmp.ne.s32.totalorder %s101, %s115
      %p117 = scmp.eq.s32.totalorder %s28, 0
      %p118 = por %p116, %p117
      %s119 = ssub.s32 %s30, %s37
      %s120 = ssub.s32 %s29, %s41
      %s121 = sor.u32 %s119, %s120
      %p122 = scmp.eq.s32.totalorder %s121, 0
      %s124 = sadd.s32 %s123, 1
      %s125 = scalar_select %p122, %s123, %s124
      %p128 = pneg %p122
      %p129 = scmp.eq.s32.totalorder %s22, 1
      %p130 = por %p128, %p129
      %p131 = scmp.ne.s32.totalorder %s123, %s126
      %p132 = scmp.eq.s32.totalorder %s22, 0
      %p133 = por %p131, %p132
      %p134 = scmp.ne.s32.totalorder %s123, %s126
      %p135 = scmp.eq.s32.totalorder %s27, 1
      %p136 = por %p134, %p135
      %p137 = scmp.ne.s32.totalorder %s126, %s127
      %p138 = scmp.eq.s32.totalorder %s27, 0
      %p139 = por %p137, %p138
      %p140 = scmp.ne.s32.totalorder %s126, %s127
      %p141 = scmp.eq.s32.totalorder %s28, 1
      %p142 = por %p140, %p141
      %p144 = scmp.ne.s32.totalorder %s127, %s143
      %p145 = scmp.eq.s32.totalorder %s28, 0
      %p146 = por %p144, %p145
      %p147 = scmp.le.s32.totalorder 1, %s22
      %p148 = scmp.lt.s32.totalorder %s22, 3
      %p149 = pnand %p147, %p148
      %p150 = pneg %p149
      // Predicated region
      $region9: #{tpu_custom_call.1} parent=5 // pred_check
        _
      $region10: #{tpu_custom_call.1} parent=5 // pred_check_branch
        %152 = sbr.rel (%p149) target = $region12
      $region11: #{tpu_custom_call.1} parent=5 // pred_region
        %s153 = ssub.s32 %s22, 1
        // Predicated region
        $region13: #{tpu_custom_call.1} parent=11 // pred_check
          %p154 = pneg %p111
        $region14: #{tpu_custom_call.1} parent=11 // pred_check_branch
          %156 = sbr.rel (%p154) target = $region16
        $region15: #{tpu_custom_call.1} parent=11 // pred_region
          _
        $region16: #{tpu_custom_call.1} parent=11 // pred_fallthru
          _
      $region12: #{tpu_custom_call.1} parent=5 // pred_fallthru
        _
      %p157 = scmp.lt.s32.totalorder %s22, 2
      // Predicated region
      $region17: #{tpu_custom_call.1} parent=5 // pred_check
        %p158 = pneg %p157
      $region18: #{tpu_custom_call.1} parent=5 // pred_check_branch
        %160 = sbr.rel (%p158) target = $region20
      $region19: #{tpu_custom_call.1} parent=5 // pred_region
        // Predicated region
        $region21: #{tpu_custom_call.1} parent=19 // pred_check
          %p161 = pneg %p56
        $region22: #{tpu_custom_call.1} parent=19 // pred_check_branch
          %163 = sbr.rel (%p161) target = $region24
        $region23: #{tpu_custom_call.1} parent=19 // pred_region
          %s164 = sand.u32 %s46, 1
          %s165 = scalar_lea.sflag [#allocation5], %s164
          %s166 = sand.u32 %s46, 1
          %s167 = smul.addr %s166, 72
          %s168 = scalar_lea.vmem [#allocation4], %s167
          %s169 = smul.u32 2, %s29
          %s171 = ssub.s32 1152, 1152
          %172 = vsyncadd %s165, %s171
          %s173 = smul.addr %s30, 18
          %s174 = sadd.s32 %s169, %s173
          %s175 = smul.addr %s174, 64
          %s176 = scalar_lea.hbm %s1, %s175
          %s177 = sshll.u32 %s168, 4
          %s178 = int_to_ptr.vmem [resolvable:$true] %s177
          %183 = dma.hbm_to_vmem [thread:$0]  %s176, 1152, %s178, %s165, 128, 128, 8
        $region24: #{tpu_custom_call.1} parent=19 // pred_fallthru
          _
        // Predicated region
        $region25: #{tpu_custom_call.1} parent=19 // pred_check
          %p184 = pneg %p84
        $region26: #{tpu_custom_call.1} parent=19 // pred_check_branch
          %186 = sbr.rel (%p184) target = $region28
        $region27: #{tpu_custom_call.1} parent=19 // pred_region
          %s187 = smul.u32 2, %s29
          %p188 = scmp.lt.s32.totalorder %s30, 1
          %s189 = scalar_select %p188, %s30, 1
          %p190 = scmp.lt.s32.totalorder %s187, 1
          %s191 = scalar_select %p190, %s187, 1
          %s192 = smul.addr %s189, 4
          %s193 = sadd.s32 %s191, %s192
          %s194 = smul.addr %s193, 8
          %s195 = scalar_lea.vmem %s2, %s194
          %s196 = smul.u32 2, %s29
        $region28: #{tpu_custom_call.1} parent=19 // pred_fallthru
          _
      $region20: #{tpu_custom_call.1} parent=5 // pred_fallthru
        _
      %p197 = scmp.le.s32.totalorder 1, %s22
      %p198 = scmp.lt.s32.totalorder %s22, 3
      %p199 = pnand %p197, %p198
      %p200 = pneg %p199
      // Predicated region
      $region29: #{tpu_custom_call.1} parent=5 // pred_check
        _
      $region30: #{tpu_custom_call.1} parent=5 // pred_check_branch
        %202 = sbr.rel (%p199) target = $region32
      $region31: #{tpu_custom_call.1} parent=5 // pred_region
        %s203 = ssub.s32 %s22, 1
        %s204 = sand.u32 %s49, 1
        %s205 = scalar_lea.sflag [#allocation5], %s204
        %s206 = sand.u32 %s49, 1
        %s207 = smul.addr %s206, 72
        %s208 = scalar_lea.vmem [#allocation4], %s207
        // Predicated region
        $region33: #{tpu_custom_call.1} parent=31 // pred_check
          %p209 = pneg %p62
        $region34: #{tpu_custom_call.1} parent=31 // pred_check_branch
          %211 = sbr.rel (%p209) target = $region36
        $region35: #{tpu_custom_call.1} parent=31 // pred_region
          %212 = dma.done %s205, 1152
        $region36: #{tpu_custom_call.1} parent=31 // pred_fallthru
          _
        %s213 = sand.u32 %s49, 1
        %s214 = scalar_lea.sflag [#allocation5], %s213
        %s215 = sand.u32 %s49, 1
        %s216 = smul.addr %s215, 72
        %s217 = scalar_lea.vmem [#allocation4], %s216
        %p218 = pneg %p62
        %p219 = pneg %p59
        %s220 = smul.u32 2, %s31
        %p221 = scmp.lt.s32.totalorder %s32, 1
        %s222 = scalar_select %p221, %s32, 1
        %p223 = scmp.lt.s32.totalorder %s220, 1
        %s224 = scalar_select %p223, %s220, 1
        %s225 = smul.addr %s222, 4
        %s226 = sadd.s32 %s224, %s225
        %s227 = smul.addr %s226, 8
        %s228 = scalar_lea.vmem %s2, %s227
        %p229 = pneg %p90
        %p230 = pneg %p87
        %p231 = pneg %p111
        %p232 = pneg %p108
        %p233 = pneg %p139
        %p234 = pneg %p136
        %s235 = sand.u32 %s126, 1
        %s236 = scalar_lea.sflag [#allocation6], %s235
        %s237 = sand.u32 %s126, 1
        %s238 = smul.addr %s237, 16
        %s239 = scalar_lea.vmem [#allocation7], %s238
        %s240 = smul.u32 2, %s31
        %s241 = smul.u32 2, %s31
        %p242 = scmp.lt.s32.totalorder %s32, 1
        %s243 = scalar_select %p242, %s32, 1
        %p244 = scmp.lt.s32.totalorder %s241, 1
        %s245 = scalar_select %p244, %s241, 1
        %s246 = smul.addr %s243, 4
        %s247 = sadd.s32 %s245, %s246
        %s248 = smul.addr %s247, 8
        %s249 = scalar_lea.vmem %s2, %s248
        %s250 = smul.u32 2, %s31
        %s251 = smul.u32 2, %s31
        %s253 = sld [smem:[#allocation3 + %s32]]
        %v254 = vld [vmem:[%s249] sm:$0xff]
        %v255 = vld [vmem:[%s249 + $0x8] sm:$0xff]
        %v256 = vld [vmem:[%s249 + $0x10] sm:$0x1]
        %v257 = vld [vmem:[%s249 + $0x18] sm:$0x1]
        %v258 = vstv %s253
        %v259 = vrcp.pop %v258
        %v260 = vmul.f32 %v254, %v259
        %v261 = vmul.f32 %v255, %v259
        %v262 = vrcp.pop 2.0
        %v263 = vmul.f32 %v260, %v262
        %v264 = vmul.f32 %v261, %v262
        %v265 = vld [vmem:[%s208] sm:$0xff]
        %v266 = vld [vmem:[%s208 + $0x8] sm:$0xff]
        %v267 = vld [vmem:[%s208 + $0x10] sm:$0xff]
        %v268 = vld [vmem:[%s208 + $0x18] sm:$0xff]
        %v269 = vld [vmem:[%s208 + $0x20] sm:$0xff]
        %v270 = vld [vmem:[%s208 + $0x28] sm:$0xff]
        %v271 = vld [vmem:[%s208 + $0x30] sm:$0xff]
        %v272 = vld [vmem:[%s208 + $0x38] sm:$0xff]
        %v273 = vld [vmem:[%s208 + $0x40] sm:$0xff]
        %v274 = vadd.f32 %v254, %v260
        %v275 = vadd.f32 %v255, %v261
        %v276 = vsub.f32 %v254, %v260
        %v277 = vsub.f32 %v255, %v261
        %v278 = vlaneseq
        %v279 = vshrl.u32 %v278, 7
        %v280 = vsub.s32 4, %v279
        %v281 = vrot.slane %v274, %v280
        %v282 = vlaneseq
        %v283 = vshrl.u32 %v282, 7
        %v284 = vsub.s32 4, %v283
        %v285 = vrot.slane %v275, %v284
        %v286 = vsub.f32 %v254, %v281
        %v287 = vsub.f32 %v255, %v285
        %v288 = vsub.f32 %v256, %v281
        %v289 = vsub.f32 %v257, %v285
        %v290 = vand.u32 2147483647, %v286
        %v291 = vand.u32 2147483647, %v287
        %v292 = vand.u32 2147483647, %v288
        %v293 = vand.u32 2147483647, %v289
        %v294 = vlaneseq
        %v295 = vshrl.u32 %v294, 7
        %v296 = vsub.s32 4, %v295
        %v297 = vrot.slane %v263, %v296
        %v298 = vlaneseq
        %v299 = vshrl.u32 %v298, 7
        %v300 = vsub.s32 4, %v299
        %v301 = vrot.slane %v264, %v300
        %vm302 = vcmp.le.f32.partialorder %v290, %v297
        %vm303 = vcmp.le.f32.partialorder %v291, %v301
        %vm304 = vcmp.le.f32.partialorder %v292, %v297
        %vm305 = vcmp.le.f32.partialorder %v293, %v301
        %v306 = vsel %vm302, 1, 0
        %v307 = vsel %vm303, 1, 0
        %v308 = vsel %vm304, 1, 0
        %v309 = vsel %vm305, 1, 0
        %v310 = vcombine.low %v306, %v307
        %v311 = vcombine.high %v306, %v307
        %v313 = vunpack.c.l.s4 1966171168
        %v314 = vunpack.c.0.s8 %v313
        %v315 = vlaneseq
        %v316 = vshrl.u32 %v315, 7
        %v317 = vsub.s32 %v314, %v316
        %v318 = vrot.slane %v310, %v317
        %v320 = vunpack.c.l.s4 1966171168
        %v321 = vunpack.c.0.s8 %v320
        %v322 = vlaneseq
        %v323 = vshrl.u32 %v322, 7
        %v324 = vsub.s32 %v321, %v323
        %v325 = vrot.slane %v311, %v324
        %v326 = vcombine.high %v318, %v318
        %v327 = vcombine.high %v325, %v325
        %v329 = vunpack.c.l.s4 1966171168
        %v330 = vunpack.c.0.s8 %v329
        %v331 = vlaneseq
        %v332 = vshrl.u32 %v331, 7
        %v333 = vsub.s32 %v330, %v332
        %v334 = vrot.slane %v318, %v333
        %v336 = vunpack.c.l.s4 1966171168
        %v337 = vunpack.c.0.s8 %v336
        %v338 = vlaneseq
        %v339 = vshrl.u32 %v338, 7
        %v340 = vsub.s32 %v337, %v339
        %v341 = vrot.slane %v325, %v340
        %v343 = vunpack.c.l.s4 1966171168
        %v344 = vunpack.c.0.s8 %v343
        %v345 = vlaneseq
        %v346 = vshrl.u32 %v345, 7
        %v347 = vsub.s32 %v344, %v346
        %v348 = vrot.slane %v326, %v347
        %v350 = vunpack.c.l.s4 1966171168
        %v351 = vunpack.c.0.s8 %v350
        %v352 = vlaneseq
        %v353 = vshrl.u32 %v352, 7
        %v354 = vsub.s32 %v351, %v353
        %v355 = vrot.slane %v327, %v354
        %v356 = vcombine.high %v334, %v334
        %v357 = vcombine.high %v341, %v341
        %v358 = vcombine.high %v348, %v348
        %v359 = vcombine.high %v355, %v355
        %v360 = vcombine.low %v308, %v309
        %v362 = vunpack.c.l.s4 1966171168
        %v363 = vunpack.c.0.s8 %v362
        %v364 = vlaneseq
        %v365 = vshrl.u32 %v364, 7
        %v366 = vsub.s32 %v363, %v365
        %v367 = vrot.slane %v360, %v366
        %v369 = vunpack.c.l.s4 1966171168
        %v370 = vunpack.c.0.s8 %v369
        %v371 = vlaneseq
        %v372 = vshrl.u32 %v371, 7
        %v373 = vsub.s32 %v370, %v372
        %v374 = vrot.slane %v367, %v373
        %vm375 = vcmp.ne.s32.totalorder %v334, 0
        %vm376 = vcmp.ne.s32.totalorder %v348, 0
        %vm377 = vcmp.ne.s32.totalorder %v356, 0
        %vm378 = vcmp.ne.s32.totalorder %v358, 0
        %vm379 = vcmp.ne.s32.totalorder %v341, 0
        %vm380 = vcmp.ne.s32.totalorder %v355, 0
        %vm381 = vcmp.ne.s32.totalorder %v357, 0
        %vm382 = vcmp.ne.s32.totalorder %v359, 0
        %vm383 = vcmp.ne.s32.totalorder %v374, 0
        %v384 = vsel %vm375, 1, 0
        %v385 = vsel %vm376, 1, 0
        %v386 = vsel %vm377, 1, 0
        %v387 = vsel %vm378, 1, 0
        %v388 = vsel %vm379, 1, 0
        %v389 = vsel %vm380, 1, 0
        %v390 = vsel %vm381, 1, 0
        %v391 = vsel %vm382, 1, 0
        %v392 = vsel %vm383, 1, 0
        %v393 = vlaneseq
        %v394 = vshrl.u32 %v393, 7
        %v395 = vsub.s32 0, %v394
        %v396 = vrot.slane %v384, %v395
        %v397 = vlaneseq
        %v398 = vshrl.u32 %v397, 7
        %v399 = vsub.s32 1, %v398
        %v400 = vrot.slane %v384, %v399
        %v401 = vlaneseq
        %v402 = vshrl.u32 %v401, 7
        %v403 = vsub.s32 0, %v402
        %v404 = vrot.slane %v385, %v403
        %v405 = vlaneseq
        %v406 = vshrl.u32 %v405, 7
        %v407 = vsub.s32 1, %v406
        %v408 = vrot.slane %v385, %v407
        %v409 = vlaneseq
        %v410 = vshrl.u32 %v409, 7
        %v411 = vsub.s32 0, %v410
        %v412 = vrot.slane %v386, %v411
        %v413 = vlaneseq
        %v414 = vshrl.u32 %v413, 7
        %v415 = vsub.s32 1, %v414
        %v416 = vrot.slane %v386, %v415
        %v417 = vlaneseq
        %v418 = vshrl.u32 %v417, 7
        %v419 = vsub.s32 0, %v418
        %v420 = vrot.slane %v387, %v419
        %v421 = vlaneseq
        %v422 = vshrl.u32 %v421, 7
        %v423 = vsub.s32 1, %v422
        %v424 = vrot.slane %v387, %v423
        %v425 = vlaneseq
        %v426 = vshrl.u32 %v425, 7
        %v427 = vsub.s32 0, %v426
        %v428 = vrot.slane %v388, %v427
        %v429 = vlaneseq
        %v430 = vshrl.u32 %v429, 7
        %v431 = vsub.s32 1, %v430
        %v432 = vrot.slane %v388, %v431
        %v433 = vlaneseq
        %v434 = vshrl.u32 %v433, 7
        %v435 = vsub.s32 0, %v434
        %v436 = vrot.slane %v389, %v435
        %v437 = vlaneseq
        %v438 = vshrl.u32 %v437, 7
        %v439 = vsub.s32 1, %v438
        %v440 = vrot.slane %v389, %v439
        %v441 = vlaneseq
        %v442 = vshrl.u32 %v441, 7
        %v443 = vsub.s32 0, %v442
        %v444 = vrot.slane %v390, %v443
        %v445 = vlaneseq
        %v446 = vshrl.u32 %v445, 7
        %v447 = vsub.s32 1, %v446
        %v448 = vrot.slane %v390, %v447
        %v449 = vlaneseq
        %v450 = vshrl.u32 %v449, 7
        %v451 = vsub.s32 0, %v450
        %v452 = vrot.slane %v391, %v451
        %v453 = vlaneseq
        %v454 = vshrl.u32 %v453, 7
        %v455 = vsub.s32 1, %v454
        %v456 = vrot.slane %v391, %v455
        %v457 = vlaneseq
        %v458 = vshrl.u32 %v457, 7
        %v459 = vsub.s32 0, %v458
        %v460 = vrot.slane %v392, %v459
        %v461 = vlaneseq
        %v462 = vshrl.u32 %v461, 7
        %v463 = vsub.s32 1, %v462
        %v464 = vrot.slane %v392, %v463
        %vm465 = vcmp.eq.s32.totalorder %v396, 1
        %vm466 = vcmp.eq.s32.totalorder %v400, 1
        %vm467 = vcmp.eq.s32.totalorder %v404, 1
        %vm468 = vcmp.eq.s32.totalorder %v408, 1
        %vm469 = vcmp.eq.s32.totalorder %v412, 1
        %vm470 = vcmp.eq.s32.totalorder %v416, 1
        %vm471 = vcmp.eq.s32.totalorder %v420, 1
        %vm472 = vcmp.eq.s32.totalorder %v424, 1
        %vm473 = vcmp.eq.s32.totalorder %v428, 1
        %vm474 = vcmp.eq.s32.totalorder %v432, 1
        %vm475 = vcmp.eq.s32.totalorder %v436, 1
        %vm476 = vcmp.eq.s32.totalorder %v440, 1
        %vm477 = vcmp.eq.s32.totalorder %v444, 1
        %vm478 = vcmp.eq.s32.totalorder %v448, 1
        %vm479 = vcmp.eq.s32.totalorder %v452, 1
        %vm480 = vcmp.eq.s32.totalorder %v456, 1
        %vm481 = vcmp.eq.s32.totalorder %v460, 1
        %vm482 = vcmp.eq.s32.totalorder %v464, 1
        %vm483 = vmpackc.low %vm466, %vm465
        %vm484 = vmpackc.low %vm468, %vm467
        %vm485 = vmpackc.low %vm470, %vm469
        %vm486 = vmpackc.low %vm472, %vm471
        %vm487 = vmpackc.low %vm474, %vm473
        %vm488 = vmpackc.low %vm476, %vm475
        %vm489 = vmpackc.low %vm478, %vm477
        %vm490 = vmpackc.low %vm480, %vm479
        %vm491 = vmpackc.low %vm482, %vm481
        %v492 = vsel %vm483, %v265, 0
        %v493 = vsel %vm484, %v266, 0
        %v494 = vsel %vm485, %v267, 0
        %v495 = vsel %vm486, %v268, 0
        %v496 = vsel %vm487, %v269, 0
        %v497 = vsel %vm488, %v270, 0
        %v498 = vsel %vm489, %v271, 0
        %v499 = vsel %vm490, %v272, 0
        %v500 = vsel %vm491, %v273, 0
        %v501 = vlaneseq
        %v502 = vshrl.u32 %v501, 7
        %v503 = vsub.s32 4, %v502
        %v504 = vrot.slane %v254, %v503
        %v505 = vlaneseq
        %v506 = vshrl.u32 %v505, 7
        %v507 = vsub.s32 4, %v506
        %v508 = vrot.slane %v255, %v507
        %v509 = vsub.f32 %v254, %v504
        %v510 = vsub.f32 %v255, %v508
        %v511 = vsub.f32 %v256, %v504
        %v512 = vsub.f32 %v257, %v508
        %v513 = vand.u32 2147483647, %v509
        %v514 = vand.u32 2147483647, %v510
        %v515 = vand.u32 2147483647, %v511
        %v516 = vand.u32 2147483647, %v512
        %vm517 = vcmp.le.f32.partialorder %v513, %v297
        %vm518 = vcmp.le.f32.partialorder %v514, %v301
        %vm519 = vcmp.le.f32.partialorder %v515, %v297
        %vm520 = vcmp.le.f32.partialorder %v516, %v301
        %v521 = vsel %vm517, 1, 0
        %v522 = vsel %vm518, 1, 0
        %v523 = vsel %vm519, 1, 0
        %v524 = vsel %vm520, 1, 0
        %v525 = vcombine.low %v521, %v522
        %v526 = vcombine.high %v521, %v522
        %v528 = vunpack.c.l.s4 1966171168
        %v529 = vunpack.c.0.s8 %v528
        %v530 = vlaneseq
        %v531 = vshrl.u32 %v530, 7
        %v532 = vsub.s32 %v529, %v531
        %v533 = vrot.slane %v525, %v532
        %v535 = vunpack.c.l.s4 1966171168
        %v536 = vunpack.c.0.s8 %v535
        %v537 = vlaneseq
        %v538 = vshrl.u32 %v537, 7
        %v539 = vsub.s32 %v536, %v538
        %v540 = vrot.slane %v526, %v539
        %v541 = vcombine.high %v533, %v533
        %v542 = vcombine.high %v540, %v540
        %v544 = vunpack.c.l.s4 1966171168
        %v545 = vunpack.c.0.s8 %v544
        %v546 = vlaneseq
        %v547 = vshrl.u32 %v546, 7
        %v548 = vsub.s32 %v545, %v547
        %v549 = vrot.slane %v533, %v548
        %v551 = vunpack.c.l.s4 1966171168
        %v552 = vunpack.c.0.s8 %v551
        %v553 = vlaneseq
        %v554 = vshrl.u32 %v553, 7
        %v555 = vsub.s32 %v552, %v554
        %v556 = vrot.slane %v540, %v555
        %v558 = vunpack.c.l.s4 1966171168
        %v559 = vunpack.c.0.s8 %v558
        %v560 = vlaneseq
        %v561 = vshrl.u32 %v560, 7
        %v562 = vsub.s32 %v559, %v561
        %v563 = vrot.slane %v541, %v562
        %v565 = vunpack.c.l.s4 1966171168
        %v566 = vunpack.c.0.s8 %v565
        %v567 = vlaneseq
        %v568 = vshrl.u32 %v567, 7
        %v569 = vsub.s32 %v566, %v568
        %v570 = vrot.slane %v542, %v569
        %v571 = vcombine.high %v549, %v549
        %v572 = vcombine.high %v556, %v556
        %v573 = vcombine.high %v563, %v563
        %v574 = vcombine.high %v570, %v570
        %v575 = vcombine.low %v523, %v524
        %v577 = vunpack.c.l.s4 1966171168
        %v578 = vunpack.c.0.s8 %v577
        %v579 = vlaneseq
        %v580 = vshrl.u32 %v579, 7
        %v581 = vsub.s32 %v578, %v580
        %v582 = vrot.slane %v575, %v581
        %v584 = vunpack.c.l.s4 1966171168
        %v585 = vunpack.c.0.s8 %v584
        %v586 = vlaneseq
        %v587 = vshrl.u32 %v586, 7
        %v588 = vsub.s32 %v585, %v587
        %v589 = vrot.slane %v582, %v588
        %vm590 = vcmp.ne.s32.totalorder %v549, 0
        %vm591 = vcmp.ne.s32.totalorder %v563, 0
        %vm592 = vcmp.ne.s32.totalorder %v571, 0
        %vm593 = vcmp.ne.s32.totalorder %v573, 0
        %vm594 = vcmp.ne.s32.totalorder %v556, 0
        %vm595 = vcmp.ne.s32.totalorder %v570, 0
        %vm596 = vcmp.ne.s32.totalorder %v572, 0
        %vm597 = vcmp.ne.s32.totalorder %v574, 0
        %vm598 = vcmp.ne.s32.totalorder %v589, 0
        %v599 = vsel %vm590, 1, 0
        %v600 = vsel %vm591, 1, 0
        %v601 = vsel %vm592, 1, 0
        %v602 = vsel %vm593, 1, 0
        %v603 = vsel %vm594, 1, 0
        %v604 = vsel %vm595, 1, 0
        %v605 = vsel %vm596, 1, 0
        %v606 = vsel %vm597, 1, 0
        %v607 = vsel %vm598, 1, 0
        %v608 = vlaneseq
        %v609 = vshrl.u32 %v608, 7
        %v610 = vsub.s32 0, %v609
        %v611 = vrot.slane %v599, %v610
        %v612 = vlaneseq
        %v613 = vshrl.u32 %v612, 7
        %v614 = vsub.s32 1, %v613
        %v615 = vrot.slane %v599, %v614
        %v616 = vlaneseq
        %v617 = vshrl.u32 %v616, 7
        %v618 = vsub.s32 0, %v617
        %v619 = vrot.slane %v600, %v618
        %v620 = vlaneseq
        %v621 = vshrl.u32 %v620, 7
        %v622 = vsub.s32 1, %v621
        %v623 = vrot.slane %v600, %v622
        %v624 = vlaneseq
        %v625 = vshrl.u32 %v624, 7
        %v626 = vsub.s32 0, %v625
        %v627 = vrot.slane %v601, %v626
        %v628 = vlaneseq
        %v629 = vshrl.u32 %v628, 7
        %v630 = vsub.s32 1, %v629
        %v631 = vrot.slane %v601, %v630
        %v632 = vlaneseq
        %v633 = vshrl.u32 %v632, 7
        %v634 = vsub.s32 0, %v633
        %v635 = vrot.slane %v602, %v634
        %v636 = vlaneseq
        %v637 = vshrl.u32 %v636, 7
        %v638 = vsub.s32 1, %v637
        %v639 = vrot.slane %v602, %v638
        %v640 = vlaneseq
        %v641 = vshrl.u32 %v640, 7
        %v642 = vsub.s32 0, %v641
        %v643 = vrot.slane %v603, %v642
        %v644 = vlaneseq
        %v645 = vshrl.u32 %v644, 7
        %v646 = vsub.s32 1, %v645
        %v647 = vrot.slane %v603, %v646
        %v648 = vlaneseq
        %v649 = vshrl.u32 %v648, 7
        %v650 = vsub.s32 0, %v649
        %v651 = vrot.slane %v604, %v650
        %v652 = vlaneseq
        %v653 = vshrl.u32 %v652, 7
        %v654 = vsub.s32 1, %v653
        %v655 = vrot.slane %v604, %v654
        %v656 = vlaneseq
        %v657 = vshrl.u32 %v656, 7
        %v658 = vsub.s32 0, %v657
        %v659 = vrot.slane %v605, %v658
        %v660 = vlaneseq
        %v661 = vshrl.u32 %v660, 7
        %v662 = vsub.s32 1, %v661
        %v663 = vrot.slane %v605, %v662
        %v664 = vlaneseq
        %v665 = vshrl.u32 %v664, 7
        %v666 = vsub.s32 0, %v665
        %v667 = vrot.slane %v606, %v666
        %v668 = vlaneseq
        %v669 = vshrl.u32 %v668, 7
        %v670 = vsub.s32 1, %v669
        %v671 = vrot.slane %v606, %v670
        %v672 = vlaneseq
        %v673 = vshrl.u32 %v672, 7
        %v674 = vsub.s32 0, %v673
        %v675 = vrot.slane %v607, %v674
        %v676 = vlaneseq
        %v677 = vshrl.u32 %v676, 7
        %v678 = vsub.s32 1, %v677
        %v679 = vrot.slane %v607, %v678
        %vm680 = vcmp.eq.s32.totalorder %v611, 1
        %vm681 = vcmp.eq.s32.totalorder %v615, 1
        %vm682 = vcmp.eq.s32.totalorder %v619, 1
        %vm683 = vcmp.eq.s32.totalorder %v623, 1
        %vm684 = vcmp.eq.s32.totalorder %v627, 1
        %vm685 = vcmp.eq.s32.totalorder %v631, 1
        %vm686 = vcmp.eq.s32.totalorder %v635, 1
        %vm687 = vcmp.eq.s32.totalorder %v639, 1
        %vm688 = vcmp.eq.s32.totalorder %v643, 1
        %vm689 = vcmp.eq.s32.totalorder %v647, 1
        %vm690 = vcmp.eq.s32.totalorder %v651, 1
        %vm691 = vcmp.eq.s32.totalorder %v655, 1
        %vm692 = vcmp.eq.s32.totalorder %v659, 1
        %vm693 = vcmp.eq.s32.totalorder %v663, 1
        %vm694 = vcmp.eq.s32.totalorder %v667, 1
        %vm695 = vcmp.eq.s32.totalorder %v671, 1
        %vm696 = vcmp.eq.s32.totalorder %v675, 1
        %vm697 = vcmp.eq.s32.totalorder %v679, 1
        %vm698 = vmpackc.low %vm681, %vm680
        %vm699 = vmpackc.low %vm683, %vm682
        %vm700 = vmpackc.low %vm685, %vm684
        %vm701 = vmpackc.low %vm687, %vm686
        %vm702 = vmpackc.low %vm689, %vm688
        %vm703 = vmpackc.low %vm691, %vm690
        %vm704 = vmpackc.low %vm693, %vm692
        %vm705 = vmpackc.low %vm695, %vm694
        %vm706 = vmpackc.low %vm697, %vm696
        %v707 = vsel %vm698, %v265, 0
        %v708 = vsel %vm699, %v266, 0
        %v709 = vsel %vm700, %v267, 0
        %v710 = vsel %vm701, %v268, 0
        %v711 = vsel %vm702, %v269, 0
        %v712 = vsel %vm703, %v270, 0
        %v713 = vsel %vm704, %v271, 0
        %v714 = vsel %vm705, %v272, 0
        %v715 = vsel %vm706, %v273, 0
        %v716 = vlaneseq
        %v717 = vshrl.u32 %v716, 7
        %v718 = vsub.s32 4, %v717
        %v719 = vrot.slane %v276, %v718
        %v720 = vlaneseq
        %v721 = vshrl.u32 %v720, 7
        %v722 = vsub.s32 4, %v721
        %v723 = vrot.slane %v277, %v722
        %v724 = vsub.f32 %v254, %v719
        %v725 = vsub.f32 %v255, %v723
        %v726 = vsub.f32 %v256, %v719
        %v727 = vsub.f32 %v257, %v723
        %v728 = vand.u32 2147483647, %v724
        %v729 = vand.u32 2147483647, %v725
        %v730 = vand.u32 2147483647, %v726
        %v731 = vand.u32 2147483647, %v727
        %vm732 = vcmp.le.f32.partialorder %v728, %v297
        %vm733 = vcmp.le.f32.partialorder %v729, %v301
        %vm734 = vcmp.le.f32.partialorder %v730, %v297
        %vm735 = vcmp.le.f32.partialorder %v731, %v301
        %v736 = vsel %vm732, 1, 0
        %v737 = vsel %vm733, 1, 0
        %v738 = vsel %vm734, 1, 0
        %v739 = vsel %vm735, 1, 0
        %v740 = vcombine.low %v736, %v737
        %v741 = vcombine.high %v736, %v737
        %v743 = vunpack.c.l.s4 1966171168
        %v744 = vunpack.c.0.s8 %v743
        %v745 = vlaneseq
        %v746 = vshrl.u32 %v745, 7
        %v747 = vsub.s32 %v744, %v746
        %v748 = vrot.slane %v740, %v747
        %v750 = vunpack.c.l.s4 1966171168
        %v751 = vunpack.c.0.s8 %v750
        %v752 = vlaneseq
        %v753 = vshrl.u32 %v752, 7
        %v754 = vsub.s32 %v751, %v753
        %v755 = vrot.slane %v741, %v754
        %v756 = vcombine.high %v748, %v748
        %v757 = vcombine.high %v755, %v755
        %v759 = vunpack.c.l.s4 1966171168
        %v760 = vunpack.c.0.s8 %v759
        %v761 = vlaneseq
        %v762 = vshrl.u32 %v761, 7
        %v763 = vsub.s32 %v760, %v762
        %v764 = vrot.slane %v748, %v763
        %v766 = vunpack.c.l.s4 1966171168
        %v767 = vunpack.c.0.s8 %v766
        %v768 = vlaneseq
        %v769 = vshrl.u32 %v768, 7
        %v770 = vsub.s32 %v767, %v769
        %v771 = vrot.slane %v755, %v770
        %v773 = vunpack.c.l.s4 1966171168
        %v774 = vunpack.c.0.s8 %v773
        %v775 = vlaneseq
        %v776 = vshrl.u32 %v775, 7
        %v777 = vsub.s32 %v774, %v776
        %v778 = vrot.slane %v756, %v777
        %v780 = vunpack.c.l.s4 1966171168
        %v781 = vunpack.c.0.s8 %v780
        %v782 = vlaneseq
        %v783 = vshrl.u32 %v782, 7
        %v784 = vsub.s32 %v781, %v783
        %v785 = vrot.slane %v757, %v784
        %v786 = vcombine.high %v764, %v764
        %v787 = vcombine.high %v771, %v771
        %v788 = vcombine.high %v778, %v778
        %v789 = vcombine.high %v785, %v785
        %v790 = vcombine.low %v738, %v739
        %v792 = vunpack.c.l.s4 1966171168
        %v793 = vunpack.c.0.s8 %v792
        %v794 = vlaneseq
        %v795 = vshrl.u32 %v794, 7
        %v796 = vsub.s32 %v793, %v795
        %v797 = vrot.slane %v790, %v796
        %v799 = vunpack.c.l.s4 1966171168
        %v800 = vunpack.c.0.s8 %v799
        %v801 = vlaneseq
        %v802 = vshrl.u32 %v801, 7
        %v803 = vsub.s32 %v800, %v802
        %v804 = vrot.slane %v797, %v803
        %vm805 = vcmp.ne.s32.totalorder %v764, 0
        %vm806 = vcmp.ne.s32.totalorder %v778, 0
        %vm807 = vcmp.ne.s32.totalorder %v786, 0
        %vm808 = vcmp.ne.s32.totalorder %v788, 0
        %vm809 = vcmp.ne.s32.totalorder %v771, 0
        %vm810 = vcmp.ne.s32.totalorder %v785, 0
        %vm811 = vcmp.ne.s32.totalorder %v787, 0
        %vm812 = vcmp.ne.s32.totalorder %v789, 0
        %vm813 = vcmp.ne.s32.totalorder %v804, 0
        %v814 = vsel %vm805, 1, 0
        %v815 = vsel %vm806, 1, 0
        %v816 = vsel %vm807, 1, 0
        %v817 = vsel %vm808, 1, 0
        %v818 = vsel %vm809, 1, 0
        %v819 = vsel %vm810, 1, 0
        %v820 = vsel %vm811, 1, 0
        %v821 = vsel %vm812, 1, 0
        %v822 = vsel %vm813, 1, 0
        %v823 = vlaneseq
        %v824 = vshrl.u32 %v823, 7
        %v825 = vsub.s32 0, %v824
        %v826 = vrot.slane %v814, %v825
        %v827 = vlaneseq
        %v828 = vshrl.u32 %v827, 7
        %v829 = vsub.s32 1, %v828
        %v830 = vrot.slane %v814, %v829
        %v831 = vlaneseq
        %v832 = vshrl.u32 %v831, 7
        %v833 = vsub.s32 0, %v832
        %v834 = vrot.slane %v815, %v833
        %v835 = vlaneseq
        %v836 = vshrl.u32 %v835, 7
        %v837 = vsub.s32 1, %v836
        %v838 = vrot.slane %v815, %v837
        %v839 = vlaneseq
        %v840 = vshrl.u32 %v839, 7
        %v841 = vsub.s32 0, %v840
        %v842 = vrot.slane %v816, %v841
        %v843 = vlaneseq
        %v844 = vshrl.u32 %v843, 7
        %v845 = vsub.s32 1, %v844
        %v846 = vrot.slane %v816, %v845
        %v847 = vlaneseq
        %v848 = vshrl.u32 %v847, 7
        %v849 = vsub.s32 0, %v848
        %v850 = vrot.slane %v817, %v849
        %v851 = vlaneseq
        %v852 = vshrl.u32 %v851, 7
        %v853 = vsub.s32 1, %v852
        %v854 = vrot.slane %v817, %v853
        %v855 = vlaneseq
        %v856 = vshrl.u32 %v855, 7
        %v857 = vsub.s32 0, %v856
        %v858 = vrot.slane %v818, %v857
        %v859 = vlaneseq
        %v860 = vshrl.u32 %v859, 7
        %v861 = vsub.s32 1, %v860
        %v862 = vrot.slane %v818, %v861
        %v863 = vlaneseq
        %v864 = vshrl.u32 %v863, 7
        %v865 = vsub.s32 0, %v864
        %v866 = vrot.slane %v819, %v865
        %v867 = vlaneseq
        %v868 = vshrl.u32 %v867, 7
        %v869 = vsub.s32 1, %v868
        %v870 = vrot.slane %v819, %v869
        %v871 = vlaneseq
        %v872 = vshrl.u32 %v871, 7
        %v873 = vsub.s32 0, %v872
        %v874 = vrot.slane %v820, %v873
        %v875 = vlaneseq
        %v876 = vshrl.u32 %v875, 7
        %v877 = vsub.s32 1, %v876
        %v878 = vrot.slane %v820, %v877
        %v879 = vlaneseq
        %v880 = vshrl.u32 %v879, 7
        %v881 = vsub.s32 0, %v880
        %v882 = vrot.slane %v821, %v881
        %v883 = vlaneseq
        %v884 = vshrl.u32 %v883, 7
        %v885 = vsub.s32 1, %v884
        %v886 = vrot.slane %v821, %v885
        %v887 = vlaneseq
        %v888 = vshrl.u32 %v887, 7
        %v889 = vsub.s32 0, %v888
        %v890 = vrot.slane %v822, %v889
        %v891 = vlaneseq
        %v892 = vshrl.u32 %v891, 7
        %v893 = vsub.s32 1, %v892
        %v894 = vrot.slane %v822, %v893
        %vm895 = vcmp.eq.s32.totalorder %v826, 1
        %vm896 = vcmp.eq.s32.totalorder %v830, 1
        %vm897 = vcmp.eq.s32.totalorder %v834, 1
        %vm898 = vcmp.eq.s32.totalorder %v838, 1
        %vm899 = vcmp.eq.s32.totalorder %v842, 1
        %vm900 = vcmp.eq.s32.totalorder %v846, 1
        %vm901 = vcmp.eq.s32.totalorder %v850, 1
        %vm902 = vcmp.eq.s32.totalorder %v854, 1
        %vm903 = vcmp.eq.s32.totalorder %v858, 1
        %vm904 = vcmp.eq.s32.totalorder %v862, 1
        %vm905 = vcmp.eq.s32.totalorder %v866, 1
        %vm906 = vcmp.eq.s32.totalorder %v870, 1
        %vm907 = vcmp.eq.s32.totalorder %v874, 1
        %vm908 = vcmp.eq.s32.totalorder %v878, 1
        %vm909 = vcmp.eq.s32.totalorder %v882, 1
        %vm910 = vcmp.eq.s32.totalorder %v886, 1
        %vm911 = vcmp.eq.s32.totalorder %v890, 1
        %vm912 = vcmp.eq.s32.totalorder %v894, 1
        %vm913 = vmpackc.low %vm896, %vm895
        %vm914 = vmpackc.low %vm898, %vm897
        %vm915 = vmpackc.low %vm900, %vm899
        %vm916 = vmpackc.low %vm902, %vm901
        %vm917 = vmpackc.low %vm904, %vm903
        %vm918 = vmpackc.low %vm906, %vm905
        %vm919 = vmpackc.low %vm908, %vm907
        %vm920 = vmpackc.low %vm910, %vm909
        %vm921 = vmpackc.low %vm912, %vm911
        %v922 = vsel %vm913, %v265, 0
        %v923 = vsel %vm914, %v266, 0
        %v924 = vsel %vm915, %v267, 0
        %v925 = vsel %vm916, %v268, 0
        %v926 = vsel %vm917, %v269, 0
        %v927 = vsel %vm918, %v270, 0
        %v928 = vsel %vm919, %v271, 0
        %v929 = vsel %vm920, %v272, 0
        %v930 = vsel %vm921, %v273, 0
        %v931 = vld [vmem:[%s3] sm:$0xff]
        %v933 = vunpack.c.l.b16 %v931
        %v934 = vunpack.c.h.b16 %v931
        %v935 = vpack.c.b16 %v933, %v933
        %v936 = vpack.c.b16 %v934, %v934
        %v965 = vunpack.c.l.b16 %v492
        %v966 = vunpack.c.h.b16 %v492
        %v967 = vunpack.c.l.b16 %v493
        %v968 = vunpack.c.h.b16 %v493
        %v969 = vunpack.c.l.b16 %v494
        %v970 = vunpack.c.h.b16 %v494
        %v971 = vunpack.c.l.b16 %v495
        %v972 = vunpack.c.h.b16 %v495
        %v973 = vunpack.c.l.b16 %v496
        %v974 = vunpack.c.h.b16 %v496
        %v975 = vunpack.c.l.b16 %v497
        %v976 = vunpack.c.h.b16 %v497
        %v977 = vunpack.c.l.b16 %v498
        %v978 = vunpack.c.h.b16 %v498
        %v979 = vunpack.c.l.b16 %v499
        %v980 = vunpack.c.h.b16 %v499
        %v981 = vunpack.c.l.b16 %v500
        %v982 = vunpack.c.h.b16 %v500
        %v983 = vunpack.c.l.b16 %v707
        %v984 = vunpack.c.h.b16 %v707
        %v985 = vunpack.c.l.b16 %v708
        %v986 = vunpack.c.h.b16 %v708
        %v987 = vunpack.c.l.b16 %v709
        %v988 = vunpack.c.h.b16 %v709
        %v989 = vunpack.c.l.b16 %v710
        %v990 = vunpack.c.h.b16 %v710
        %v991 = vunpack.c.l.b16 %v711
        %v992 = vunpack.c.h.b16 %v711
        %v993 = vunpack.c.l.b16 %v712
        %v994 = vunpack.c.h.b16 %v712
        %v995 = vunpack.c.l.b16 %v713
        %v996 = vunpack.c.h.b16 %v713
        %v997 = vunpack.c.l.b16 %v714
        %v998 = vunpack.c.h.b16 %v714
        %v999 = vunpack.c.l.b16 %v715
        %v1000 = vunpack.c.h.b16 %v715
        %v1001 = vunpack.c.l.b16 %v922
        %v1002 = vunpack.c.h.b16 %v922
        %v1003 = vunpack.c.l.b16 %v923
        %v1004 = vunpack.c.h.b16 %v923
        %v1005 = vunpack.c.l.b16 %v924
        %v1006 = vunpack.c.h.b16 %v924
        %v1007 = vunpack.c.l.b16 %v925
        %v1008 = vunpack.c.h.b16 %v925
        %v1009 = vunpack.c.l.b16 %v926
        %v1010 = vunpack.c.h.b16 %v926
        %v1011 = vunpack.c.l.b16 %v927
        %v1012 = vunpack.c.h.b16 %v927
        %v1013 = vunpack.c.l.b16 %v928
        %v1014 = vunpack.c.h.b16 %v928
        %v1015 = vunpack.c.l.b16 %v929
        %v1016 = vunpack.c.h.b16 %v929
        %v1017 = vunpack.c.l.b16 %v930
        %v1018 = vunpack.c.h.b16 %v930
        %v1019 = vpack.c.b16 %v967, %v965
        %v1020 = vpack.c.b16 %v968, %v966
        %v1021 = vpack.c.b16 %v971, %v969
        %v1022 = vpack.c.b16 %v972, %v970
        %v1023 = vpack.c.b16 %v975, %v973
        %v1024 = vpack.c.b16 %v976, %v974
        %v1025 = vpack.c.b16 %v979, %v977
        %v1026 = vpack.c.b16 %v980, %v978
        %v1027 = vpack.c.b16 %v983, %v981
        %v1028 = vpack.c.b16 %v984, %v982
        %v1029 = vpack.c.b16 %v987, %v985
        %v1030 = vpack.c.b16 %v988, %v986
        %v1031 = vpack.c.b16 %v991, %v989
        %v1032 = vpack.c.b16 %v992, %v990
        %v1033 = vpack.c.b16 %v995, %v993
        %v1034 = vpack.c.b16 %v996, %v994
        %v1035 = vpack.c.b16 %v999, %v997
        %v1036 = vpack.c.b16 %v1000, %v998
        %v1037 = vpack.c.b16 %v1003, %v1001
        %v1038 = vpack.c.b16 %v1004, %v1002
        %v1039 = vpack.c.b16 %v1007, %v1005
        %v1040 = vpack.c.b16 %v1008, %v1006
        %v1041 = vpack.c.b16 %v1011, %v1009
        %v1042 = vpack.c.b16 %v1012, %v1010
        %v1043 = vpack.c.b16 %v1015, %v1013
        %v1044 = vpack.c.b16 %v1016, %v1014
        %v1045 = vpack.c.b16 %v1017, %v1017
        %v1046 = vpack.c.b16 %v1018, %v1018
        %vm1073 = vcmask 719872
        %v1075 = vsel %vm1073, %v936, 0
        %vm1077 = vcmask 1043456
        %v1079 = vsel %vm1077, %v1045, 0
        %v1082 = vsel %vm1077, %v1046, 0
        %1084 = vmatprep.subr.bf16.mxu0 %v1034
        %1085 = vmatpush1.bf16.msra.mxu0 %v1033
        %1086 = vmatprep.subr.bf16.mxu0 %v1032
        %1087 = vmatpush1.bf16.msra.mxu0 %v1031
        %1088 = vmatprep.subr.bf16.mxu0 %v1030
        %1089 = vmatpush1.bf16.msra.mxu0 %v1029
        %1090 = vmatprep.subr.bf16.mxu0 %v1028
        %1091 = vmatpush1.bf16.msra.mxu0 %v1027
        %1092 = vmatprep.subr.bf16.mxu0 %v1026
        %1093 = vmatpush1.bf16.msra.mxu0 %v1025
        %1094 = vmatprep.subr.bf16.mxu0 %v1024
        %1095 = vmatpush1.bf16.msra.mxu0 %v1023
        %1096 = vmatprep.subr.bf16.mxu0 %v1022
        %1097 = vmatpush1.bf16.msra.mxu0 %v1021
        %1098 = vmatprep.subr.bf16.mxu0 %v1020
        %1099 = vmatpush1.bf16.msra.mxu0 %v1019
        %1100 = vmatprep.subr.bf16.mxu0 0
        %1101 = vmatpush2.bf16.msra.mxu0 0
        %1102 = vmatprep.subr.bf16.mxu0 0
        %1103 = vmatpush2.bf16.msra.mxu0 0
        %1104 = vmatprep.subr.bf16.mxu0 %v1082
        %1105 = vmatpush2.bf16.msra.mxu0 %v1079
        %1106 = vmatprep.subr.bf16.mxu0 %v1044
        %1107 = vmatpush2.bf16.msra.mxu0 %v1043
        %1108 = vmatprep.subr.bf16.mxu0 %v1042
        %1109 = vmatpush2.bf16.msra.mxu0 %v1041
        %1110 = vmatprep.subr.bf16.mxu0 %v1040
        %1111 = vmatpush2.bf16.msra.mxu0 %v1039
        %1112 = vmatprep.subr.bf16.mxu0 %v1038
        %1113 = vmatpush2.bf16.msra.mxu0 %v1037
        %1114 = vmatprep.subr.bf16.mxu0 %v1036
        %1115 = vmatpush2.bf16.msra.mxu0 %v1035
        %1116 = vmatprep.mubr.bf16.mxu0 %v1075
        %1117 = vmatmul.mubr.bf16.gmra.mxu0 %v935
        %v1118 = vpop.f32.mrf.mxu0
        %v1119 = vadd.f32 0.0, %v1118
        %v1120 = vpop.f32.mrf.mxu0
        %v1121 = vadd.f32 0.0, %v1120
        %v1122 = vpop.f32.mrf.mxu0
        %v1123 = vpop.f32.mrf.mxu0
        %1124 = vdwg.mxu0
        %1125 = vst [vmem:[%s239] sm:$0xff] %v1119
        %1126 = vst [vmem:[%s239 + $0x8] sm:$0xff] %v1121
        %s1127 = sand.u32 %s126, 1
        %s1128 = scalar_lea.sflag [#allocation6], %s1127
        %s1129 = sand.u32 %s126, 1
        %s1130 = smul.addr %s1129, 16
        %s1131 = scalar_lea.vmem [#allocation7], %s1130
        // Predicated region
        $region37: #{tpu_custom_call.1} parent=31 // pred_check
          %p1132 = pneg %p136
        $region38: #{tpu_custom_call.1} parent=31 // pred_check_branch
          %1134 = sbr.rel (%p1132) target = $region40
        $region39: #{tpu_custom_call.1} parent=31 // pred_region
          %s1135 = smul.u32 2, %s31
          %s1137 = ssub.s32 256, 256
          %1138 = vsyncadd %s1128, %s1137
          %s1139 = smul.addr %s32, 2
          %s1140 = sadd.s32 %s1135, %s1139
          %s1141 = smul.addr %s1140, 128
          %s1142 = scalar_lea.hbm %s4, %s1141
          %s1144 = sshll.u32 %s1131, 4
          %s1145 = int_to_ptr.vmem [resolvable:$true] %s1144
          %1147 = dma.vmem_to_hbm [thread:$0]  %s1145, 256, %s1142, %s1128
        $region40: #{tpu_custom_call.1} parent=31 // pred_fallthru
          _
      $region32: #{tpu_custom_call.1} parent=5 // pred_fallthru
        _
      %p1148 = scmp.le.s32.totalorder 2, %s22
      // Predicated region
      $region41: #{tpu_custom_call.1} parent=5 // pred_check
        %p1149 = pneg %p1148
      $region42: #{tpu_custom_call.1} parent=5 // pred_check_branch
        %1151 = sbr.rel (%p1149) target = $region44
      $region43: #{tpu_custom_call.1} parent=5 // pred_region
        %s1152 = ssub.s32 %s22, 2
        // Predicated region
        $region45: #{tpu_custom_call.1} parent=43 // pred_check
          %p1153 = pneg %p142
        $region46: #{tpu_custom_call.1} parent=43 // pred_check_branch
          %1155 = sbr.rel (%p1153) target = $region48
        $region47: #{tpu_custom_call.1} parent=43 // pred_region
          %s1156 = sand.u32 %s127, 1
          %s1157 = scalar_lea.sflag [#allocation6], %s1156
          %s1158 = sand.u32 %s127, 1
          %s1159 = smul.addr %s1158, 16
          %s1160 = scalar_lea.vmem [#allocation7], %s1159
          %1161 = dma.done %s1157, 256
        $region48: #{tpu_custom_call.1} parent=43 // pred_fallthru
          _
      $region44: #{tpu_custom_call.1} parent=5 // pred_fallthru
        _
    $region6: #{tpu_custom_call.1} parent=1 // loop_footer
      %s26 = sadd.s32 1, %s22
    $region7: #{tpu_custom_call.1} parent=1 // loop_footer_branch
      %21 = sbr.rel target = $region3
    $region8: #{tpu_custom_call.1} parent=1 // loop_exit
      _
    %1162 = vsyncpa [#allocation5], 1
    %s1163 = scalar_lea.sflag [#allocation5], 1
    %1164 = vsyncpa %s1163, 1
    %1165 = vsyncpa [#allocation6], 1
    %s1166 = scalar_lea.sflag [#allocation6], 1
    %1167 = vsyncpa %s1166, 1

// kernel: tpu_custom_call.1
$region0: #{tpu_custom_call.1}
  #allocation0 [shape = 'u32[]', space=smem, size = 0x4, offset = 0x4, fixed_abs, tag = 'smem constant byte address 0x4 - core index']
  #allocation1 [shape = 'u32[144,128]{1,0:T(1,128)}', space=vmem, size = 0x12000, scoped, tag = 'internal scratch']
  #allocation2 [shape = 's32[1]{0}', space=sflag, size = 0x4, scoped, tag = 'scoped memory for tpu_custom_call.1']
  #allocation3 [shape = 'u8[512]{0}', space=smem, size = 0x200, scoped, tag = 'prefetched SMEM operand 0']
  %s0 = inlined_call_operand.vmem [shape: f32[2], index: 0, kind: input, shape index: {}]
  %s1 = inlined_call_operand.hbm [shape: bf16[2,72,256], index: 1, kind: input, shape index: {}]
  %s2 = inlined_call_operand.vmem [shape: f32[2,9,256], index: 2, kind: input, shape index: {}]
  %s3 = inlined_call_operand.vmem [shape: bf16[8,216], index: 3, kind: input, shape index: {}]
  %s4 = inlined_call_operand.hbm [shape: f32[2,8,256], index: 4, kind: output, shape index: {}]
  %s5 = sld [smem:[#allocation0]]
  $region49: #{tpu_custom_call.1} parent=0
    _
  %s7 = ssub.s32 1, %s5
  %s8 = scalar_select 0, %s7, %s5
  %s9 = sshll.u32 %s0, 4
  %s10 = int_to_ptr.vmem [resolvable:$true] %s9
  %12 = dma.vmem_to_smem %s10, 16, [#allocation3], [#allocation2]
  %13 = dma.done [#allocation2], 16
  %14 = sfence
  $region1: #{tpu_custom_call.1} parent=0
    #allocation4 [shape = 'u8[73728]{0}', space=vmem, size = 0x12000, scoped, tag = 'input window, operand 1']
    #allocation5 [shape = 's32[2]{0}', space=sflag, size = 0x8, scoped, tag = 'scoped memory for tpu_custom_call.1']
    #allocation6 [shape = 's32[2]{0}', space=sflag, size = 0x8, scoped, tag = 'scoped memory for tpu_custom_call.1']
    #allocation7 [shape = 'u8[16384]{0}', space=vmem, size = 0x4000, scoped, tag = 'output window, operand 0']
    %15 = vsyncpa [#allocation5], 0
    %s16 = scalar_lea.sflag [#allocation5], 1
    %17 = vsyncpa %s16, 0
    %18 = vsyncpa [#allocation6], 0
    %s19 = scalar_lea.sflag [#allocation6], 1
    %20 = vsyncpa %s19, 0
    loop: start=0, step=1, limit=4
    $region2: #{tpu_custom_call.1} parent=1 // loop_pre_header
      _
    $region3: #{tpu_custom_call.1} parent=1 // loop_header
      %s22 = sphi 0, %s26
      %p23 = scmp.ge.s32.totalorder %s22, 4
      %s29 = sphi 0, %s41
      %s30 = sphi 0, %s37
      %s31 = sphi 0, %s29
      %s32 = sphi 0, %s30
      %s33 = sphi 0, %s31
      %s34 = sphi 0, %s32
      %s46 = sphi 0, %s48
      %s49 = sphi 0, %s46
      %s50 = sphi 0, %s49
      %s66 = sphi 0, %s50
      %s74 = sphi 0, %s76
      %s77 = sphi 0, %s74
      %s78 = sphi 0, %s77
      %s94 = sphi 0, %s78
      %s98 = sphi 0, %s98
      %s100 = sphi 0, %s98
      %s101 = sphi 0, %s100
      %s115 = sphi 0, %s101
      %s123 = sphi 0, %s125
      %s126 = sphi 0, %s123
      %s127 = sphi 0, %s126
      %s143 = sphi 0, %s127
    $region4: #{tpu_custom_call.1} parent=1 // loop_header_branch
      %25 = sbr.rel (%p23) target = $region8
    $region5: #{tpu_custom_call.1} parent=1 // loop_body
      %s27 = ssub.s32 %s22, 1
      %s28 = ssub.s32 %s22, 2
      %s35 = sadd.s32 1, %s30
      %p36 = scmp.ge.s32.totalorder %s35, 2
      %s37 = scalar_select %p36, 0, %s35
      %s38 = sadd.s32 1, %s29
      %s39 = scalar_select %p36, %s38, %s29
      %p40 = scmp.ge.s32.totalorder %s39, 1
      %s41 = scalar_select %p40, 0, %s39
      %s42 = ssub.s32 %s30, %s37
      %s43 = ssub.s32 %s29, %s41
      %s44 = sor.u32 %s42, %s43
      %p45 = scmp.eq.s32.totalorder %s44, 0
      %s47 = sadd.s32 %s46, 1
      %s48 = scalar_select %p45, %s46, %s47
      %p51 = pneg %p45
      %p52 = scmp.eq.s32.totalorder %s22, 1
      %p53 = por %p51, %p52
      %p54 = scmp.ne.s32.totalorder %s46, %s49
      %p55 = scmp.eq.s32.totalorder %s22, 0
      %p56 = por %p54, %p55
      %p57 = scmp.ne.s32.totalorder %s46, %s49
      %p58 = scmp.eq.s32.totalorder %s27, 1
      %p59 = por %p57, %p58
      %p60 = scmp.ne.s32.totalorder %s49, %s50
      %p61 = scmp.eq.s32.totalorder %s27, 0
      %p62 = por %p60, %p61
      %p63 = scmp.ne.s32.totalorder %s49, %s50
      %p64 = scmp.eq.s32.totalorder %s28, 1
      %p65 = por %p63, %p64
      %p67 = scmp.ne.s32.totalorder %s50, %s66
      %p68 = scmp.eq.s32.totalorder %s28, 0
      %p69 = por %p67, %p68
      %s70 = ssub.s32 %s30, %s37
      %s71 = ssub.s32 %s29, %s41
      %s72 = sor.u32 %s70, %s71
      %p73 = scmp.eq.s32.totalorder %s72, 0
      %s75 = sadd.s32 %s74, 1
      %s76 = scalar_select %p73, %s74, %s75
      %p79 = pneg %p73
      %p80 = scmp.eq.s32.totalorder %s22, 1
      %p81 = por %p79, %p80
      %p82 = scmp.ne.s32.totalorder %s74, %s77
      %p83 = scmp.eq.s32.totalorder %s22, 0
      %p84 = por %p82, %p83
      %p85 = scmp.ne.s32.totalorder %s74, %s77
      %p86 = scmp.eq.s32.totalorder %s27, 1
      %p87 = por %p85, %p86
      %p88 = scmp.ne.s32.totalorder %s77, %s78
      %p89 = scmp.eq.s32.totalorder %s27, 0
      %p90 = por %p88, %p89
      %p91 = scmp.ne.s32.totalorder %s77, %s78
      %p92 = scmp.eq.s32.totalorder %s28, 1
      %p93 = por %p91, %p92
      %p95 = scmp.ne.s32.totalorder %s78, %s94
      %p96 = scmp.eq.s32.totalorder %s28, 0
      %p97 = por %p95, %p96
      %s99 = sadd.s32 %s98, 1
      %p102 = scmp.eq.s32.totalorder %s22, 1
      %p103 = scmp.ne.s32.totalorder %s98, %s100
      %p104 = scmp.eq.s32.totalorder %s22, 0
      %p105 = por %p103, %p104
      %p106 = scmp.ne.s32.totalorder %s98, %s100
      %p107 = scmp.eq.s32.totalorder %s27, 1
      %p108 = por %p106, %p107
      %p109 = scmp.ne.s32.totalorder %s100, %s101
      %p110 = scmp.eq.s32.totalorder %s27, 0
      %p111 = por %p109, %p110
      %p112 = scmp.ne.s32.totalorder %s100, %s101
      %p113 = scmp.eq.s32.totalorder %s28, 1
      %p114 = por %p112, %p113
      %p116 = scmp.ne.s32.totalorder %s101, %s115
      %p117 = scmp.eq.s32.totalorder %s28, 0
      %p118 = por %p116, %p117
      %s119 = ssub.s32 %s30, %s37
      %s120 = ssub.s32 %s29, %s41
      %s121 = sor.u32 %s119, %s120
      %p122 = scmp.eq.s32.totalorder %s121, 0
      %s124 = sadd.s32 %s123, 1
      %s125 = scalar_select %p122, %s123, %s124
      %p128 = pneg %p122
      %p129 = scmp.eq.s32.totalorder %s22, 1
      %p130 = por %p128, %p129
      %p131 = scmp.ne.s32.totalorder %s123, %s126
      %p132 = scmp.eq.s32.totalorder %s22, 0
      %p133 = por %p131, %p132
      %p134 = scmp.ne.s32.totalorder %s123, %s126
      %p135 = scmp.eq.s32.totalorder %s27, 1
      %p136 = por %p134, %p135
      %p137 = scmp.ne.s32.totalorder %s126, %s127
      %p138 = scmp.eq.s32.totalorder %s27, 0
      %p139 = por %p137, %p138
      %p140 = scmp.ne.s32.totalorder %s126, %s127
      %p141 = scmp.eq.s32.totalorder %s28, 1
      %p142 = por %p140, %p141
      %p144 = scmp.ne.s32.totalorder %s127, %s143
      %p145 = scmp.eq.s32.totalorder %s28, 0
      %p146 = por %p144, %p145
      %p147 = scmp.le.s32.totalorder 1, %s22
      %p148 = scmp.lt.s32.totalorder %s22, 3
      %p149 = pnand %p147, %p148
      %p150 = pneg %p149
      // Predicated region
      $region9: #{tpu_custom_call.1} parent=5 // pred_check
        _
      $region10: #{tpu_custom_call.1} parent=5 // pred_check_branch
        %152 = sbr.rel (%p149) target = $region12
      $region11: #{tpu_custom_call.1} parent=5 // pred_region
        %s153 = ssub.s32 %s22, 1
        // Predicated region
        $region13: #{tpu_custom_call.1} parent=11 // pred_check
          %p154 = pneg %p111
        $region14: #{tpu_custom_call.1} parent=11 // pred_check_branch
          %156 = sbr.rel (%p154) target = $region16
        $region15: #{tpu_custom_call.1} parent=11 // pred_region
          _
        $region16: #{tpu_custom_call.1} parent=11 // pred_fallthru
          _
      $region12: #{tpu_custom_call.1} parent=5 // pred_fallthru
        _
      %p157 = scmp.lt.s32.totalorder %s22, 2
      // Predicated region
      $region17: #{tpu_custom_call.1} parent=5 // pred_check
        %p158 = pneg %p157
      $region18: #{tpu_custom_call.1} parent=5 // pred_check_branch
        %160 = sbr.rel (%p158) target = $region20
      $region19: #{tpu_custom_call.1} parent=5 // pred_region
        // Predicated region
        $region21: #{tpu_custom_call.1} parent=19 // pred_check
          %p161 = pneg %p56
        $region22: #{tpu_custom_call.1} parent=19 // pred_check_branch
          %163 = sbr.rel (%p161) target = $region24
        $region23: #{tpu_custom_call.1} parent=19 // pred_region
          %s164 = sand.u32 %s46, 1
          %s165 = scalar_lea.sflag [#allocation5], %s164
          %s166 = sand.u32 %s46, 1
          %s167 = smul.addr %s166, 72
          %s168 = scalar_lea.vmem [#allocation4], %s167
          %s169 = smul.u32 2, %s29
          %s171 = ssub.s32 1152, 1152
          %172 = vsyncadd %s165, %s171
          %s173 = smul.addr %s30, 18
          %s174 = sadd.s32 %s169, %s173
          %s175 = smul.addr %s174, 64
          %s176 = scalar_lea.hbm %s1, %s175
          %s177 = sshll.u32 %s168, 4
          %s178 = int_to_ptr.vmem [resolvable:$true] %s177
          %183 = dma.hbm_to_vmem [thread:$0]  %s176, 1152, %s178, %s165, 128, 128, 8
        $region24: #{tpu_custom_call.1} parent=19 // pred_fallthru
          _
        // Predicated region
        $region25: #{tpu_custom_call.1} parent=19 // pred_check
          %p184 = pneg %p84
        $region26: #{tpu_custom_call.1} parent=19 // pred_check_branch
          %186 = sbr.rel (%p184) target = $region28
        $region27: #{tpu_custom_call.1} parent=19 // pred_region
          %s187 = smul.u32 2, %s29
          %p188 = scmp.lt.s32.totalorder %s30, 1
          %s189 = scalar_select %p188, %s30, 1
          %p190 = scmp.lt.s32.totalorder %s187, 1
          %s191 = scalar_select %p190, %s187, 1
          %s192 = smul.addr %s189, 4
          %s193 = sadd.s32 %s191, %s192
          %s194 = smul.addr %s193, 8
          %s195 = scalar_lea.vmem %s2, %s194
          %s196 = smul.u32 2, %s29
        $region28: #{tpu_custom_call.1} parent=19 // pred_fallthru
          _
      $region20: #{tpu_custom_call.1} parent=5 // pred_fallthru
        _
      %p197 = scmp.le.s32.totalorder 1, %s22
      %p198 = scmp.lt.s32.totalorder %s22, 3
      %p199 = pnand %p197, %p198
      %p200 = pneg %p199
      // Predicated region
      $region29: #{tpu_custom_call.1} parent=5 // pred_check
        _
      $region30: #{tpu_custom_call.1} parent=5 // pred_check_branch
        %202 = sbr.rel (%p199) target = $region32
      $region31: #{tpu_custom_call.1} parent=5 // pred_region
        %s203 = ssub.s32 %s22, 1
        %s204 = sand.u32 %s49, 1
        %s205 = scalar_lea.sflag [#allocation5], %s204
        %s206 = sand.u32 %s49, 1
        %s207 = smul.addr %s206, 72
        %s208 = scalar_lea.vmem [#allocation4], %s207
        // Predicated region
        $region33: #{tpu_custom_call.1} parent=31 // pred_check
          %p209 = pneg %p62
        $region34: #{tpu_custom_call.1} parent=31 // pred_check_branch
          %211 = sbr.rel (%p209) target = $region36
        $region35: #{tpu_custom_call.1} parent=31 // pred_region
          %212 = dma.done %s205, 1152
        $region36: #{tpu_custom_call.1} parent=31 // pred_fallthru
          _
        %s213 = sand.u32 %s49, 1
        %s214 = scalar_lea.sflag [#allocation5], %s213
        %s215 = sand.u32 %s49, 1
        %s216 = smul.addr %s215, 72
        %s217 = scalar_lea.vmem [#allocation4], %s216
        %p218 = pneg %p62
        %p219 = pneg %p59
        %s220 = smul.u32 2, %s31
        %p221 = scmp.lt.s32.totalorder %s32, 1
        %s222 = scalar_select %p221, %s32, 1
        %p223 = scmp.lt.s32.totalorder %s220, 1
        %s224 = scalar_select %p223, %s220, 1
        %s225 = smul.addr %s222, 4
        %s226 = sadd.s32 %s224, %s225
        %s227 = smul.addr %s226, 8
        %s228 = scalar_lea.vmem %s2, %s227
        %p229 = pneg %p90
        %p230 = pneg %p87
        %p231 = pneg %p111
        %p232 = pneg %p108
        %p233 = pneg %p139
        %p234 = pneg %p136
        %s235 = sand.u32 %s126, 1
        %s236 = scalar_lea.sflag [#allocation6], %s235
        %s237 = sand.u32 %s126, 1
        %s238 = smul.addr %s237, 16
        %s239 = scalar_lea.vmem [#allocation7], %s238
        %s240 = smul.u32 2, %s31
        %s241 = smul.u32 2, %s31
        %p242 = scmp.lt.s32.totalorder %s32, 1
        %s243 = scalar_select %p242, %s32, 1
        %p244 = scmp.lt.s32.totalorder %s241, 1
        %s245 = scalar_select %p244, %s241, 1
        %s246 = smul.addr %s243, 4
        %s247 = sadd.s32 %s245, %s246
        %s248 = smul.addr %s247, 8
        %s249 = scalar_lea.vmem %s2, %s248
        %s250 = smul.u32 2, %s31
        %s251 = smul.u32 2, %s31
        %s253 = sld [smem:[#allocation3 + %s32]]
        %v254 = vld [vmem:[%s249] sm:$0xff]
        %v255 = vld [vmem:[%s249 + $0x8] sm:$0xff]
        %v256 = vld [vmem:[%s249 + $0x10] sm:$0x1]
        %v257 = vld [vmem:[%s249 + $0x18] sm:$0x1]
        %v258 = vstv %s253
        %v259 = vrcp.pop %v258
        %v260 = vmul.f32 %v254, %v259
        %v261 = vmul.f32 %v255, %v259
        %v262 = vrcp.pop 2.0
        %v263 = vmul.f32 %v260, %v262
        %v264 = vmul.f32 %v261, %v262
        %v265 = vld [vmem:[%s208] sm:$0xff]
        %v266 = vld [vmem:[%s208 + $0x8] sm:$0xff]
        %v267 = vld [vmem:[%s208 + $0x10] sm:$0xff]
        %v268 = vld [vmem:[%s208 + $0x18] sm:$0xff]
        %v269 = vld [vmem:[%s208 + $0x20] sm:$0xff]
        %v270 = vld [vmem:[%s208 + $0x28] sm:$0xff]
        %v271 = vld [vmem:[%s208 + $0x30] sm:$0xff]
        %v272 = vld [vmem:[%s208 + $0x38] sm:$0xff]
        %v273 = vld [vmem:[%s208 + $0x40] sm:$0xff]
        %v274 = vadd.f32 %v254, %v260
        %v275 = vadd.f32 %v255, %v261
        %v276 = vsub.f32 %v254, %v260
        %v277 = vsub.f32 %v255, %v261
        %v278 = vlaneseq
        %v279 = vshrl.u32 %v278, 7
        %v280 = vsub.s32 4, %v279
        %v281 = vrot.slane %v274, %v280
        %v282 = vlaneseq
        %v283 = vshrl.u32 %v282, 7
        %v284 = vsub.s32 4, %v283
        %v285 = vrot.slane %v275, %v284
        %v286 = vsub.f32 %v254, %v281
        %v287 = vsub.f32 %v255, %v285
        %v288 = vsub.f32 %v256, %v281
        %v289 = vsub.f32 %v257, %v285
        %v290 = vand.u32 2147483647, %v286
        %v291 = vand.u32 2147483647, %v287
        %v292 = vand.u32 2147483647, %v288
        %v293 = vand.u32 2147483647, %v289
        %v294 = vlaneseq
        %v295 = vshrl.u32 %v294, 7
        %v296 = vsub.s32 4, %v295
        %v297 = vrot.slane %v263, %v296
        %v298 = vlaneseq
        %v299 = vshrl.u32 %v298, 7
        %v300 = vsub.s32 4, %v299
        %v301 = vrot.slane %v264, %v300
        %vm302 = vcmp.le.f32.partialorder %v290, %v297
        %vm303 = vcmp.le.f32.partialorder %v291, %v301
        %vm304 = vcmp.le.f32.partialorder %v292, %v297
        %vm305 = vcmp.le.f32.partialorder %v293, %v301
        %v306 = vsel %vm302, 1, 0
        %v307 = vsel %vm303, 1, 0
        %v308 = vsel %vm304, 1, 0
        %v309 = vsel %vm305, 1, 0
        %v310 = vcombine.low %v306, %v307
        %v311 = vcombine.high %v306, %v307
        %v313 = vunpack.c.l.s4 1966171168
        %v314 = vunpack.c.0.s8 %v313
        %v315 = vlaneseq
        %v316 = vshrl.u32 %v315, 7
        %v317 = vsub.s32 %v314, %v316
        %v318 = vrot.slane %v310, %v317
        %v320 = vunpack.c.l.s4 1966171168
        %v321 = vunpack.c.0.s8 %v320
        %v322 = vlaneseq
        %v323 = vshrl.u32 %v322, 7
        %v324 = vsub.s32 %v321, %v323
        %v325 = vrot.slane %v311, %v324
        %v326 = vcombine.high %v318, %v318
        %v327 = vcombine.high %v325, %v325
        %v329 = vunpack.c.l.s4 1966171168
        %v330 = vunpack.c.0.s8 %v329
        %v331 = vlaneseq
        %v332 = vshrl.u32 %v331, 7
        %v333 = vsub.s32 %v330, %v332
        %v334 = vrot.slane %v318, %v333
        %v336 = vunpack.c.l.s4 1966171168
        %v337 = vunpack.c.0.s8 %v336
        %v338 = vlaneseq
        %v339 = vshrl.u32 %v338, 7
        %v340 = vsub.s32 %v337, %v339
        %v341 = vrot.slane %v325, %v340
        %v343 = vunpack.c.l.s4 1966171168
        %v344 = vunpack.c.0.s8 %v343
        %v345 = vlaneseq
        %v346 = vshrl.u32 %v345, 7
        %v347 = vsub.s32 %v344, %v346
        %v348 = vrot.slane %v326, %v347
        %v350 = vunpack.c.l.s4 1966171168
        %v351 = vunpack.c.0.s8 %v350
        %v352 = vlaneseq
        %v353 = vshrl.u32 %v352, 7
        %v354 = vsub.s32 %v351, %v353
        %v355 = vrot.slane %v327, %v354
        %v356 = vcombine.high %v334, %v334
        %v357 = vcombine.high %v341, %v341
        %v358 = vcombine.high %v348, %v348
        %v359 = vcombine.high %v355, %v355
        %v360 = vcombine.low %v308, %v309
        %v362 = vunpack.c.l.s4 1966171168
        %v363 = vunpack.c.0.s8 %v362
        %v364 = vlaneseq
        %v365 = vshrl.u32 %v364, 7
        %v366 = vsub.s32 %v363, %v365
        %v367 = vrot.slane %v360, %v366
        %v369 = vunpack.c.l.s4 1966171168
        %v370 = vunpack.c.0.s8 %v369
        %v371 = vlaneseq
        %v372 = vshrl.u32 %v371, 7
        %v373 = vsub.s32 %v370, %v372
        %v374 = vrot.slane %v367, %v373
        %vm375 = vcmp.ne.s32.totalorder %v334, 0
        %vm376 = vcmp.ne.s32.totalorder %v348, 0
        %vm377 = vcmp.ne.s32.totalorder %v356, 0
        %vm378 = vcmp.ne.s32.totalorder %v358, 0
        %vm379 = vcmp.ne.s32.totalorder %v341, 0
        %vm380 = vcmp.ne.s32.totalorder %v355, 0
        %vm381 = vcmp.ne.s32.totalorder %v357, 0
        %vm382 = vcmp.ne.s32.totalorder %v359, 0
        %vm383 = vcmp.ne.s32.totalorder %v374, 0
        %v384 = vsel %vm375, 1, 0
        %v385 = vsel %vm376, 1, 0
        %v386 = vsel %vm377, 1, 0
        %v387 = vsel %vm378, 1, 0
        %v388 = vsel %vm379, 1, 0
        %v389 = vsel %vm380, 1, 0
        %v390 = vsel %vm381, 1, 0
        %v391 = vsel %vm382, 1, 0
        %v392 = vsel %vm383, 1, 0
        %v393 = vlaneseq
        %v394 = vshrl.u32 %v393, 7
        %v395 = vsub.s32 0, %v394
        %v396 = vrot.slane %v384, %v395
        %v397 = vlaneseq
        %v398 = vshrl.u32 %v397, 7
        %v399 = vsub.s32 1, %v398
        %v400 = vrot.slane %v384, %v399
        %v401 = vlaneseq
        %v402 = vshrl.u32 %v401, 7
        %v403 = vsub.s32 0, %v402
        %v404 = vrot.slane %v385, %v403
        %v405 = vlaneseq
        %v406 = vshrl.u32 %v405, 7
        %v407 = vsub.s32 1, %v406
        %v408 = vrot.slane %v385, %v407
        %v409 = vlaneseq
        %v410 = vshrl.u32 %v409, 7
        %v411 = vsub.s32 0, %v410
        %v412 = vrot.slane %v386, %v411
        %v413 = vlaneseq
        %v414 = vshrl.u32 %v413, 7
        %v415 = vsub.s32 1, %v414
        %v416 = vrot.slane %v386, %v415
        %v417 = vlaneseq
        %v418 = vshrl.u32 %v417, 7
        %v419 = vsub.s32 0, %v418
        %v420 = vrot.slane %v387, %v419
        %v421 = vlaneseq
        %v422 = vshrl.u32 %v421, 7
        %v423 = vsub.s32 1, %v422
        %v424 = vrot.slane %v387, %v423
        %v425 = vlaneseq
        %v426 = vshrl.u32 %v425, 7
        %v427 = vsub.s32 0, %v426
        %v428 = vrot.slane %v388, %v427
        %v429 = vlaneseq
        %v430 = vshrl.u32 %v429, 7
        %v431 = vsub.s32 1, %v430
        %v432 = vrot.slane %v388, %v431
        %v433 = vlaneseq
        %v434 = vshrl.u32 %v433, 7
        %v435 = vsub.s32 0, %v434
        %v436 = vrot.slane %v389, %v435
        %v437 = vlaneseq
        %v438 = vshrl.u32 %v437, 7
        %v439 = vsub.s32 1, %v438
        %v440 = vrot.slane %v389, %v439
        %v441 = vlaneseq
        %v442 = vshrl.u32 %v441, 7
        %v443 = vsub.s32 0, %v442
        %v444 = vrot.slane %v390, %v443
        %v445 = vlaneseq
        %v446 = vshrl.u32 %v445, 7
        %v447 = vsub.s32 1, %v446
        %v448 = vrot.slane %v390, %v447
        %v449 = vlaneseq
        %v450 = vshrl.u32 %v449, 7
        %v451 = vsub.s32 0, %v450
        %v452 = vrot.slane %v391, %v451
        %v453 = vlaneseq
        %v454 = vshrl.u32 %v453, 7
        %v455 = vsub.s32 1, %v454
        %v456 = vrot.slane %v391, %v455
        %v457 = vlaneseq
        %v458 = vshrl.u32 %v457, 7
        %v459 = vsub.s32 0, %v458
        %v460 = vrot.slane %v392, %v459
        %v461 = vlaneseq
        %v462 = vshrl.u32 %v461, 7
        %v463 = vsub.s32 1, %v462
        %v464 = vrot.slane %v392, %v463
        %vm465 = vcmp.eq.s32.totalorder %v396, 1
        %vm466 = vcmp.eq.s32.totalorder %v400, 1
        %vm467 = vcmp.eq.s32.totalorder %v404, 1
        %vm468 = vcmp.eq.s32.totalorder %v408, 1
        %vm469 = vcmp.eq.s32.totalorder %v412, 1
        %vm470 = vcmp.eq.s32.totalorder %v416, 1
        %vm471 = vcmp.eq.s32.totalorder %v420, 1
        %vm472 = vcmp.eq.s32.totalorder %v424, 1
        %vm473 = vcmp.eq.s32.totalorder %v428, 1
        %vm474 = vcmp.eq.s32.totalorder %v432, 1
        %vm475 = vcmp.eq.s32.totalorder %v436, 1
        %vm476 = vcmp.eq.s32.totalorder %v440, 1
        %vm477 = vcmp.eq.s32.totalorder %v444, 1
        %vm478 = vcmp.eq.s32.totalorder %v448, 1
        %vm479 = vcmp.eq.s32.totalorder %v452, 1
        %vm480 = vcmp.eq.s32.totalorder %v456, 1
        %vm481 = vcmp.eq.s32.totalorder %v460, 1
        %vm482 = vcmp.eq.s32.totalorder %v464, 1
        %vm483 = vmpackc.low %vm466, %vm465
        %vm484 = vmpackc.low %vm468, %vm467
        %vm485 = vmpackc.low %vm470, %vm469
        %vm486 = vmpackc.low %vm472, %vm471
        %vm487 = vmpackc.low %vm474, %vm473
        %vm488 = vmpackc.low %vm476, %vm475
        %vm489 = vmpackc.low %vm478, %vm477
        %vm490 = vmpackc.low %vm480, %vm479
        %vm491 = vmpackc.low %vm482, %vm481
        %v492 = vsel %vm483, %v265, 0
        %v493 = vsel %vm484, %v266, 0
        %v494 = vsel %vm485, %v267, 0
        %v495 = vsel %vm486, %v268, 0
        %v496 = vsel %vm487, %v269, 0
        %v497 = vsel %vm488, %v270, 0
        %v498 = vsel %vm489, %v271, 0
        %v499 = vsel %vm490, %v272, 0
        %v500 = vsel %vm491, %v273, 0
        %v501 = vlaneseq
        %v502 = vshrl.u32 %v501, 7
        %v503 = vsub.s32 4, %v502
        %v504 = vrot.slane %v254, %v503
        %v505 = vlaneseq
        %v506 = vshrl.u32 %v505, 7
        %v507 = vsub.s32 4, %v506
        %v508 = vrot.slane %v255, %v507
        %v509 = vsub.f32 %v254, %v504
        %v510 = vsub.f32 %v255, %v508
        %v511 = vsub.f32 %v256, %v504
        %v512 = vsub.f32 %v257, %v508
        %v513 = vand.u32 2147483647, %v509
        %v514 = vand.u32 2147483647, %v510
        %v515 = vand.u32 2147483647, %v511
        %v516 = vand.u32 2147483647, %v512
        %vm517 = vcmp.le.f32.partialorder %v513, %v297
        %vm518 = vcmp.le.f32.partialorder %v514, %v301
        %vm519 = vcmp.le.f32.partialorder %v515, %v297
        %vm520 = vcmp.le.f32.partialorder %v516, %v301
        %v521 = vsel %vm517, 1, 0
        %v522 = vsel %vm518, 1, 0
        %v523 = vsel %vm519, 1, 0
        %v524 = vsel %vm520, 1, 0
        %v525 = vcombine.low %v521, %v522
        %v526 = vcombine.high %v521, %v522
        %v528 = vunpack.c.l.s4 1966171168
        %v529 = vunpack.c.0.s8 %v528
        %v530 = vlaneseq
        %v531 = vshrl.u32 %v530, 7
        %v532 = vsub.s32 %v529, %v531
        %v533 = vrot.slane %v525, %v532
        %v535 = vunpack.c.l.s4 1966171168
        %v536 = vunpack.c.0.s8 %v535
        %v537 = vlaneseq
        %v538 = vshrl.u32 %v537, 7
        %v539 = vsub.s32 %v536, %v538
        %v540 = vrot.slane %v526, %v539
        %v541 = vcombine.high %v533, %v533
        %v542 = vcombine.high %v540, %v540
        %v544 = vunpack.c.l.s4 1966171168
        %v545 = vunpack.c.0.s8 %v544
        %v546 = vlaneseq
        %v547 = vshrl.u32 %v546, 7
        %v548 = vsub.s32 %v545, %v547
        %v549 = vrot.slane %v533, %v548
        %v551 = vunpack.c.l.s4 1966171168
        %v552 = vunpack.c.0.s8 %v551
        %v553 = vlaneseq
        %v554 = vshrl.u32 %v553, 7
        %v555 = vsub.s32 %v552, %v554
        %v556 = vrot.slane %v540, %v555
        %v558 = vunpack.c.l.s4 1966171168
        %v559 = vunpack.c.0.s8 %v558
        %v560 = vlaneseq
        %v561 = vshrl.u32 %v560, 7
        %v562 = vsub.s32 %v559, %v561
        %v563 = vrot.slane %v541, %v562
        %v565 = vunpack.c.l.s4 1966171168
        %v566 = vunpack.c.0.s8 %v565
        %v567 = vlaneseq
        %v568 = vshrl.u32 %v567, 7
        %v569 = vsub.s32 %v566, %v568
        %v570 = vrot.slane %v542, %v569
        %v571 = vcombine.high %v549, %v549
        %v572 = vcombine.high %v556, %v556
        %v573 = vcombine.high %v563, %v563
        %v574 = vcombine.high %v570, %v570
        %v575 = vcombine.low %v523, %v524
        %v577 = vunpack.c.l.s4 1966171168
        %v578 = vunpack.c.0.s8 %v577
        %v579 = vlaneseq
        %v580 = vshrl.u32 %v579, 7
        %v581 = vsub.s32 %v578, %v580
        %v582 = vrot.slane %v575, %v581
        %v584 = vunpack.c.l.s4 1966171168
        %v585 = vunpack.c.0.s8 %v584
        %v586 = vlaneseq
        %v587 = vshrl.u32 %v586, 7
        %v588 = vsub.s32 %v585, %v587
        %v589 = vrot.slane %v582, %v588
        %vm590 = vcmp.ne.s32.totalorder %v549, 0
        %vm591 = vcmp.ne.s32.totalorder %v563, 0
        %vm592 = vcmp.ne.s32.totalorder %v571, 0
        %vm593 = vcmp.ne.s32.totalorder %v573, 0
        %vm594 = vcmp.ne.s32.totalorder %v556, 0
        %vm595 = vcmp.ne.s32.totalorder %v570, 0
        %vm596 = vcmp.ne.s32.totalorder %v572, 0
        %vm597 = vcmp.ne.s32.totalorder %v574, 0
        %vm598 = vcmp.ne.s32.totalorder %v589, 0
        %v599 = vsel %vm590, 1, 0
        %v600 = vsel %vm591, 1, 0
        %v601 = vsel %vm592, 1, 0
        %v602 = vsel %vm593, 1, 0
        %v603 = vsel %vm594, 1, 0
        %v604 = vsel %vm595, 1, 0
        %v605 = vsel %vm596, 1, 0
        %v606 = vsel %vm597, 1, 0
        %v607 = vsel %vm598, 1, 0
        %v608 = vlaneseq
        %v609 = vshrl.u32 %v608, 7
        %v610 = vsub.s32 0, %v609
        %v611 = vrot.slane %v599, %v610
        %v612 = vlaneseq
        %v613 = vshrl.u32 %v612, 7
        %v614 = vsub.s32 1, %v613
        %v615 = vrot.slane %v599, %v614
        %v616 = vlaneseq
        %v617 = vshrl.u32 %v616, 7
        %v618 = vsub.s32 0, %v617
        %v619 = vrot.slane %v600, %v618
        %v620 = vlaneseq
        %v621 = vshrl.u32 %v620, 7
        %v622 = vsub.s32 1, %v621
        %v623 = vrot.slane %v600, %v622
        %v624 = vlaneseq
        %v625 = vshrl.u32 %v624, 7
        %v626 = vsub.s32 0, %v625
        %v627 = vrot.slane %v601, %v626
        %v628 = vlaneseq
        %v629 = vshrl.u32 %v628, 7
        %v630 = vsub.s32 1, %v629
        %v631 = vrot.slane %v601, %v630
        %v632 = vlaneseq
        %v633 = vshrl.u32 %v632, 7
        %v634 = vsub.s32 0, %v633
        %v635 = vrot.slane %v602, %v634
        %v636 = vlaneseq
        %v637 = vshrl.u32 %v636, 7
        %v638 = vsub.s32 1, %v637
        %v639 = vrot.slane %v602, %v638
        %v640 = vlaneseq
        %v641 = vshrl.u32 %v640, 7
        %v642 = vsub.s32 0, %v641
        %v643 = vrot.slane %v603, %v642
        %v644 = vlaneseq
        %v645 = vshrl.u32 %v644, 7
        %v646 = vsub.s32 1, %v645
        %v647 = vrot.slane %v603, %v646
        %v648 = vlaneseq
        %v649 = vshrl.u32 %v648, 7
        %v650 = vsub.s32 0, %v649
        %v651 = vrot.slane %v604, %v650
        %v652 = vlaneseq
        %v653 = vshrl.u32 %v652, 7
        %v654 = vsub.s32 1, %v653
        %v655 = vrot.slane %v604, %v654
        %v656 = vlaneseq
        %v657 = vshrl.u32 %v656, 7
        %v658 = vsub.s32 0, %v657
        %v659 = vrot.slane %v605, %v658
        %v660 = vlaneseq
        %v661 = vshrl.u32 %v660, 7
        %v662 = vsub.s32 1, %v661
        %v663 = vrot.slane %v605, %v662
        %v664 = vlaneseq
        %v665 = vshrl.u32 %v664, 7
        %v666 = vsub.s32 0, %v665
        %v667 = vrot.slane %v606, %v666
        %v668 = vlaneseq
        %v669 = vshrl.u32 %v668, 7
        %v670 = vsub.s32 1, %v669
        %v671 = vrot.slane %v606, %v670
        %v672 = vlaneseq
        %v673 = vshrl.u32 %v672, 7
        %v674 = vsub.s32 0, %v673
        %v675 = vrot.slane %v607, %v674
        %v676 = vlaneseq
        %v677 = vshrl.u32 %v676, 7
        %v678 = vsub.s32 1, %v677
        %v679 = vrot.slane %v607, %v678
        %vm680 = vcmp.eq.s32.totalorder %v611, 1
        %vm681 = vcmp.eq.s32.totalorder %v615, 1
        %vm682 = vcmp.eq.s32.totalorder %v619, 1
        %vm683 = vcmp.eq.s32.totalorder %v623, 1
        %vm684 = vcmp.eq.s32.totalorder %v627, 1
        %vm685 = vcmp.eq.s32.totalorder %v631, 1
        %vm686 = vcmp.eq.s32.totalorder %v635, 1
        %vm687 = vcmp.eq.s32.totalorder %v639, 1
        %vm688 = vcmp.eq.s32.totalorder %v643, 1
        %vm689 = vcmp.eq.s32.totalorder %v647, 1
        %vm690 = vcmp.eq.s32.totalorder %v651, 1
        %vm691 = vcmp.eq.s32.totalorder %v655, 1
        %vm692 = vcmp.eq.s32.totalorder %v659, 1
        %vm693 = vcmp.eq.s32.totalorder %v663, 1
        %vm694 = vcmp.eq.s32.totalorder %v667, 1
        %vm695 = vcmp.eq.s32.totalorder %v671, 1
        %vm696 = vcmp.eq.s32.totalorder %v675, 1
        %vm697 = vcmp.eq.s32.totalorder %v679, 1
        %vm698 = vmpackc.low %vm681, %vm680
        %vm699 = vmpackc.low %vm683, %vm682
        %vm700 = vmpackc.low %vm685, %vm684
        %vm701 = vmpackc.low %vm687, %vm686
        %vm702 = vmpackc.low %vm689, %vm688
        %vm703 = vmpackc.low %vm691, %vm690
        %vm704 = vmpackc.low %vm693, %vm692
        %vm705 = vmpackc.low %vm695, %vm694
        %vm706 = vmpackc.low %vm697, %vm696
        %v707 = vsel %vm698, %v265, 0
        %v708 = vsel %vm699, %v266, 0
        %v709 = vsel %vm700, %v267, 0
        %v710 = vsel %vm701, %v268, 0
        %v711 = vsel %vm702, %v269, 0
        %v712 = vsel %vm703, %v270, 0
        %v713 = vsel %vm704, %v271, 0
        %v714 = vsel %vm705, %v272, 0
        %v715 = vsel %vm706, %v273, 0
        %v716 = vlaneseq
        %v717 = vshrl.u32 %v716, 7
        %v718 = vsub.s32 4, %v717
        %v719 = vrot.slane %v276, %v718
        %v720 = vlaneseq
        %v721 = vshrl.u32 %v720, 7
        %v722 = vsub.s32 4, %v721
        %v723 = vrot.slane %v277, %v722
        %v724 = vsub.f32 %v254, %v719
        %v725 = vsub.f32 %v255, %v723
        %v726 = vsub.f32 %v256, %v719
        %v727 = vsub.f32 %v257, %v723
        %v728 = vand.u32 2147483647, %v724
        %v729 = vand.u32 2147483647, %v725
        %v730 = vand.u32 2147483647, %v726
        %v731 = vand.u32 2147483647, %v727
        %vm732 = vcmp.le.f32.partialorder %v728, %v297
        %vm733 = vcmp.le.f32.partialorder %v729, %v301
        %vm734 = vcmp.le.f32.partialorder %v730, %v297
        %vm735 = vcmp.le.f32.partialorder %v731, %v301
        %v736 = vsel %vm732, 1, 0
        %v737 = vsel %vm733, 1, 0
        %v738 = vsel %vm734, 1, 0
        %v739 = vsel %vm735, 1, 0
        %v740 = vcombine.low %v736, %v737
        %v741 = vcombine.high %v736, %v737
        %v743 = vunpack.c.l.s4 1966171168
        %v744 = vunpack.c.0.s8 %v743
        %v745 = vlaneseq
        %v746 = vshrl.u32 %v745, 7
        %v747 = vsub.s32 %v744, %v746
        %v748 = vrot.slane %v740, %v747
        %v750 = vunpack.c.l.s4 1966171168
        %v751 = vunpack.c.0.s8 %v750
        %v752 = vlaneseq
        %v753 = vshrl.u32 %v752, 7
        %v754 = vsub.s32 %v751, %v753
        %v755 = vrot.slane %v741, %v754
        %v756 = vcombine.high %v748, %v748
        %v757 = vcombine.high %v755, %v755
        %v759 = vunpack.c.l.s4 1966171168
        %v760 = vunpack.c.0.s8 %v759
        %v761 = vlaneseq
        %v762 = vshrl.u32 %v761, 7
        %v763 = vsub.s32 %v760, %v762
        %v764 = vrot.slane %v748, %v763
        %v766 = vunpack.c.l.s4 1966171168
        %v767 = vunpack.c.0.s8 %v766
        %v768 = vlaneseq
        %v769 = vshrl.u32 %v768, 7
        %v770 = vsub.s32 %v767, %v769
        %v771 = vrot.slane %v755, %v770
        %v773 = vunpack.c.l.s4 1966171168
        %v774 = vunpack.c.0.s8 %v773
        %v775 = vlaneseq
        %v776 = vshrl.u32 %v775, 7
        %v777 = vsub.s32 %v774, %v776
        %v778 = vrot.slane %v756, %v777
        %v780 = vunpack.c.l.s4 1966171168
        %v781 = vunpack.c.0.s8 %v780
        %v782 = vlaneseq
        %v783 = vshrl.u32 %v782, 7
        %v784 = vsub.s32 %v781, %v783
        %v785 = vrot.slane %v757, %v784
        %v786 = vcombine.high %v764, %v764
        %v787 = vcombine.high %v771, %v771
        %v788 = vcombine.high %v778, %v778
        %v789 = vcombine.high %v785, %v785
        %v790 = vcombine.low %v738, %v739
        %v792 = vunpack.c.l.s4 1966171168
        %v793 = vunpack.c.0.s8 %v792
        %v794 = vlaneseq
        %v795 = vshrl.u32 %v794, 7
        %v796 = vsub.s32 %v793, %v795
        %v797 = vrot.slane %v790, %v796
        %v799 = vunpack.c.l.s4 1966171168
        %v800 = vunpack.c.0.s8 %v799
        %v801 = vlaneseq
        %v802 = vshrl.u32 %v801, 7
        %v803 = vsub.s32 %v800, %v802
        %v804 = vrot.slane %v797, %v803
        %vm805 = vcmp.ne.s32.totalorder %v764, 0
        %vm806 = vcmp.ne.s32.totalorder %v778, 0
        %vm807 = vcmp.ne.s32.totalorder %v786, 0
        %vm808 = vcmp.ne.s32.totalorder %v788, 0
        %vm809 = vcmp.ne.s32.totalorder %v771, 0
        %vm810 = vcmp.ne.s32.totalorder %v785, 0
        %vm811 = vcmp.ne.s32.totalorder %v787, 0
        %vm812 = vcmp.ne.s32.totalorder %v789, 0
        %vm813 = vcmp.ne.s32.totalorder %v804, 0
        %v814 = vsel %vm805, 1, 0
        %v815 = vsel %vm806, 1, 0
        %v816 = vsel %vm807, 1, 0
        %v817 = vsel %vm808, 1, 0
        %v818 = vsel %vm809, 1, 0
        %v819 = vsel %vm810, 1, 0
        %v820 = vsel %vm811, 1, 0
        %v821 = vsel %vm812, 1, 0
        %v822 = vsel %vm813, 1, 0
        %v823 = vlaneseq
        %v824 = vshrl.u32 %v823, 7
        %v825 = vsub.s32 0, %v824
        %v826 = vrot.slane %v814, %v825
        %v827 = vlaneseq
        %v828 = vshrl.u32 %v827, 7
        %v829 = vsub.s32 1, %v828
        %v830 = vrot.slane %v814, %v829
        %v831 = vlaneseq
        %v832 = vshrl.u32 %v831, 7
        %v833 = vsub.s32 0, %v832
        %v834 = vrot.slane %v815, %v833
        %v835 = vlaneseq
        %v836 = vshrl.u32 %v835, 7
        %v837 = vsub.s32 1, %v836
        %v838 = vrot.slane %v815, %v837
        %v839 = vlaneseq
        %v840 = vshrl.u32 %v839, 7
        %v841 = vsub.s32 0, %v840
        %v842 = vrot.slane %v816, %v841
        %v843 = vlaneseq
        %v844 = vshrl.u32 %v843, 7
        %v845 = vsub.s32 1, %v844
        %v846 = vrot.slane %v816, %v845
        %v847 = vlaneseq
        %v848 = vshrl.u32 %v847, 7
        %v849 = vsub.s32 0, %v848
        %v850 = vrot.slane %v817, %v849
        %v851 = vlaneseq
        %v852 = vshrl.u32 %v851, 7
        %v853 = vsub.s32 1, %v852
        %v854 = vrot.slane %v817, %v853
        %v855 = vlaneseq
        %v856 = vshrl.u32 %v855, 7
        %v857 = vsub.s32 0, %v856
        %v858 = vrot.slane %v818, %v857
        %v859 = vlaneseq
        %v860 = vshrl.u32 %v859, 7
        %v861 = vsub.s32 1, %v860
        %v862 = vrot.slane %v818, %v861
        %v863 = vlaneseq
        %v864 = vshrl.u32 %v863, 7
        %v865 = vsub.s32 0, %v864
        %v866 = vrot.slane %v819, %v865
        %v867 = vlaneseq
        %v868 = vshrl.u32 %v867, 7
        %v869 = vsub.s32 1, %v868
        %v870 = vrot.slane %v819, %v869
        %v871 = vlaneseq
        %v872 = vshrl.u32 %v871, 7
        %v873 = vsub.s32 0, %v872
        %v874 = vrot.slane %v820, %v873
        %v875 = vlaneseq
        %v876 = vshrl.u32 %v875, 7
        %v877 = vsub.s32 1, %v876
        %v878 = vrot.slane %v820, %v877
        %v879 = vlaneseq
        %v880 = vshrl.u32 %v879, 7
        %v881 = vsub.s32 0, %v880
        %v882 = vrot.slane %v821, %v881
        %v883 = vlaneseq
        %v884 = vshrl.u32 %v883, 7
        %v885 = vsub.s32 1, %v884
        %v886 = vrot.slane %v821, %v885
        %v887 = vlaneseq
        %v888 = vshrl.u32 %v887, 7
        %v889 = vsub.s32 0, %v888
        %v890 = vrot.slane %v822, %v889
        %v891 = vlaneseq
        %v892 = vshrl.u32 %v891, 7
        %v893 = vsub.s32 1, %v892
        %v894 = vrot.slane %v822, %v893
        %vm895 = vcmp.eq.s32.totalorder %v826, 1
        %vm896 = vcmp.eq.s32.totalorder %v830, 1
        %vm897 = vcmp.eq.s32.totalorder %v834, 1
        %vm898 = vcmp.eq.s32.totalorder %v838, 1
        %vm899 = vcmp.eq.s32.totalorder %v842, 1
        %vm900 = vcmp.eq.s32.totalorder %v846, 1
        %vm901 = vcmp.eq.s32.totalorder %v850, 1
        %vm902 = vcmp.eq.s32.totalorder %v854, 1
        %vm903 = vcmp.eq.s32.totalorder %v858, 1
        %vm904 = vcmp.eq.s32.totalorder %v862, 1
        %vm905 = vcmp.eq.s32.totalorder %v866, 1
        %vm906 = vcmp.eq.s32.totalorder %v870, 1
        %vm907 = vcmp.eq.s32.totalorder %v874, 1
        %vm908 = vcmp.eq.s32.totalorder %v878, 1
        %vm909 = vcmp.eq.s32.totalorder %v882, 1
        %vm910 = vcmp.eq.s32.totalorder %v886, 1
        %vm911 = vcmp.eq.s32.totalorder %v890, 1
        %vm912 = vcmp.eq.s32.totalorder %v894, 1
        %vm913 = vmpackc.low %vm896, %vm895
        %vm914 = vmpackc.low %vm898, %vm897
        %vm915 = vmpackc.low %vm900, %vm899
        %vm916 = vmpackc.low %vm902, %vm901
        %vm917 = vmpackc.low %vm904, %vm903
        %vm918 = vmpackc.low %vm906, %vm905
        %vm919 = vmpackc.low %vm908, %vm907
        %vm920 = vmpackc.low %vm910, %vm909
        %vm921 = vmpackc.low %vm912, %vm911
        %v922 = vsel %vm913, %v265, 0
        %v923 = vsel %vm914, %v266, 0
        %v924 = vsel %vm915, %v267, 0
        %v925 = vsel %vm916, %v268, 0
        %v926 = vsel %vm917, %v269, 0
        %v927 = vsel %vm918, %v270, 0
        %v928 = vsel %vm919, %v271, 0
        %v929 = vsel %vm920, %v272, 0
        %v930 = vsel %vm921, %v273, 0
        %v931 = vld [vmem:[%s3] sm:$0xff]
        %v933 = vunpack.c.l.b16 %v931
        %v934 = vunpack.c.h.b16 %v931
        %v935 = vpack.c.b16 %v933, %v933
        %v936 = vpack.c.b16 %v934, %v934
        %v965 = vunpack.c.l.b16 %v492
        %v966 = vunpack.c.h.b16 %v492
        %v967 = vunpack.c.l.b16 %v493
        %v968 = vunpack.c.h.b16 %v493
        %v969 = vunpack.c.l.b16 %v494
        %v970 = vunpack.c.h.b16 %v494
        %v971 = vunpack.c.l.b16 %v495
        %v972 = vunpack.c.h.b16 %v495
        %v973 = vunpack.c.l.b16 %v496
        %v974 = vunpack.c.h.b16 %v496
        %v975 = vunpack.c.l.b16 %v497
        %v976 = vunpack.c.h.b16 %v497
        %v977 = vunpack.c.l.b16 %v498
        %v978 = vunpack.c.h.b16 %v498
        %v979 = vunpack.c.l.b16 %v499
        %v980 = vunpack.c.h.b16 %v499
        %v981 = vunpack.c.l.b16 %v500
        %v982 = vunpack.c.h.b16 %v500
        %v983 = vunpack.c.l.b16 %v707
        %v984 = vunpack.c.h.b16 %v707
        %v985 = vunpack.c.l.b16 %v708
        %v986 = vunpack.c.h.b16 %v708
        %v987 = vunpack.c.l.b16 %v709
        %v988 = vunpack.c.h.b16 %v709
        %v989 = vunpack.c.l.b16 %v710
        %v990 = vunpack.c.h.b16 %v710
        %v991 = vunpack.c.l.b16 %v711
        %v992 = vunpack.c.h.b16 %v711
        %v993 = vunpack.c.l.b16 %v712
        %v994 = vunpack.c.h.b16 %v712
        %v995 = vunpack.c.l.b16 %v713
        %v996 = vunpack.c.h.b16 %v713
        %v997 = vunpack.c.l.b16 %v714
        %v998 = vunpack.c.h.b16 %v714
        %v999 = vunpack.c.l.b16 %v715
        %v1000 = vunpack.c.h.b16 %v715
        %v1001 = vunpack.c.l.b16 %v922
        %v1002 = vunpack.c.h.b16 %v922
        %v1003 = vunpack.c.l.b16 %v923
        %v1004 = vunpack.c.h.b16 %v923
        %v1005 = vunpack.c.l.b16 %v924
        %v1006 = vunpack.c.h.b16 %v924
        %v1007 = vunpack.c.l.b16 %v925
        %v1008 = vunpack.c.h.b16 %v925
        %v1009 = vunpack.c.l.b16 %v926
        %v1010 = vunpack.c.h.b16 %v926
        %v1011 = vunpack.c.l.b16 %v927
        %v1012 = vunpack.c.h.b16 %v927
        %v1013 = vunpack.c.l.b16 %v928
        %v1014 = vunpack.c.h.b16 %v928
        %v1015 = vunpack.c.l.b16 %v929
        %v1016 = vunpack.c.h.b16 %v929
        %v1017 = vunpack.c.l.b16 %v930
        %v1018 = vunpack.c.h.b16 %v930
        %v1019 = vpack.c.b16 %v967, %v965
        %v1020 = vpack.c.b16 %v968, %v966
        %v1021 = vpack.c.b16 %v971, %v969
        %v1022 = vpack.c.b16 %v972, %v970
        %v1023 = vpack.c.b16 %v975, %v973
        %v1024 = vpack.c.b16 %v976, %v974
        %v1025 = vpack.c.b16 %v979, %v977
        %v1026 = vpack.c.b16 %v980, %v978
        %v1027 = vpack.c.b16 %v983, %v981
        %v1028 = vpack.c.b16 %v984, %v982
        %v1029 = vpack.c.b16 %v987, %v985
        %v1030 = vpack.c.b16 %v988, %v986
        %v1031 = vpack.c.b16 %v991, %v989
        %v1032 = vpack.c.b16 %v992, %v990
        %v1033 = vpack.c.b16 %v995, %v993
        %v1034 = vpack.c.b16 %v996, %v994
        %v1035 = vpack.c.b16 %v999, %v997
        %v1036 = vpack.c.b16 %v1000, %v998
        %v1037 = vpack.c.b16 %v1003, %v1001
        %v1038 = vpack.c.b16 %v1004, %v1002
        %v1039 = vpack.c.b16 %v1007, %v1005
        %v1040 = vpack.c.b16 %v1008, %v1006
        %v1041 = vpack.c.b16 %v1011, %v1009
        %v1042 = vpack.c.b16 %v1012, %v1010
        %v1043 = vpack.c.b16 %v1015, %v1013
        %v1044 = vpack.c.b16 %v1016, %v1014
        %v1045 = vpack.c.b16 %v1017, %v1017
        %v1046 = vpack.c.b16 %v1018, %v1018
        %vm1073 = vcmask 719872
        %v1075 = vsel %vm1073, %v936, 0
        %vm1077 = vcmask 1043456
        %v1079 = vsel %vm1077, %v1045, 0
        %v1082 = vsel %vm1077, %v1046, 0
        %1084 = vmatprep.subr.bf16.mxu0 %v1034
        %1085 = vmatpush1.bf16.msra.mxu0 %v1033
        %1086 = vmatprep.subr.bf16.mxu0 %v1032
        %1087 = vmatpush1.bf16.msra.mxu0 %v1031
        %1088 = vmatprep.subr.bf16.mxu0 %v1030
        %1089 = vmatpush1.bf16.msra.mxu0 %v1029
        %1090 = vmatprep.subr.bf16.mxu0 %v1028
        %1091 = vmatpush1.bf16.msra.mxu0 %v1027
        %1092 = vmatprep.subr.bf16.mxu0 %v1026
        %1093 = vmatpush1.bf16.msra.mxu0 %v1025
        %1094 = vmatprep.subr.bf16.mxu0 %v1024
        %1095 = vmatpush1.bf16.msra.mxu0 %v1023
        %1096 = vmatprep.subr.bf16.mxu0 %v1022
        %1097 = vmatpush1.bf16.msra.mxu0 %v1021
        %1098 = vmatprep.subr.bf16.mxu0 %v1020
        %1099 = vmatpush1.bf16.msra.mxu0 %v1019
        %1100 = vmatprep.subr.bf16.mxu0 0
        %1101 = vmatpush2.bf16.msra.mxu0 0
        %1102 = vmatprep.subr.bf16.mxu0 0
        %1103 = vmatpush2.bf16.msra.mxu0 0
        %1104 = vmatprep.subr.bf16.mxu0 %v1082
        %1105 = vmatpush2.bf16.msra.mxu0 %v1079
        %1106 = vmatprep.subr.bf16.mxu0 %v1044
        %1107 = vmatpush2.bf16.msra.mxu0 %v1043
        %1108 = vmatprep.subr.bf16.mxu0 %v1042
        %1109 = vmatpush2.bf16.msra.mxu0 %v1041
        %1110 = vmatprep.subr.bf16.mxu0 %v1040
        %1111 = vmatpush2.bf16.msra.mxu0 %v1039
        %1112 = vmatprep.subr.bf16.mxu0 %v1038
        %1113 = vmatpush2.bf16.msra.mxu0 %v1037
        %1114 = vmatprep.subr.bf16.mxu0 %v1036
        %1115 = vmatpush2.bf16.msra.mxu0 %v1035
        %1116 = vmatprep.mubr.bf16.mxu0 %v1075
        %1117 = vmatmul.mubr.bf16.gmra.mxu0 %v935
        %v1118 = vpop.f32.mrf.mxu0
        %v1119 = vadd.f32 0.0, %v1118
        %v1120 = vpop.f32.mrf.mxu0
        %v1121 = vadd.f32 0.0, %v1120
        %v1122 = vpop.f32.mrf.mxu0
        %v1123 = vpop.f32.mrf.mxu0
        %1124 = vdwg.mxu0
        %1125 = vst [vmem:[%s239] sm:$0xff] %v1119
        %1126 = vst [vmem:[%s239 + $0x8] sm:$0xff] %v1121
        %s1127 = sand.u32 %s126, 1
        %s1128 = scalar_lea.sflag [#allocation6], %s1127
        %s1129 = sand.u32 %s126, 1
        %s1130 = smul.addr %s1129, 16
        %s1131 = scalar_lea.vmem [#allocation7], %s1130
        // Predicated region
        $region37: #{tpu_custom_call.1} parent=31 // pred_check
          %p1132 = pneg %p136
        $region38: #{tpu_custom_call.1} parent=31 // pred_check_branch
          %1134 = sbr.rel (%p1132) target = $region40
        $region39: #{tpu_custom_call.1} parent=31 // pred_region
          %s1135 = smul.u32 2, %s31
          %s1137 = ssub.s32 256, 256
          %1138 = vsyncadd %s1128, %s1137
          %s1139 = smul.addr %s32, 2
          %s1140 = sadd.s32 %s1135, %s1139
          %s1141 = smul.addr %s1140, 128
          %s1142 = scalar_lea.hbm %s4, %s1141
          %s1144 = sshll.u32 %s1131, 4
          %s1145 = int_to_ptr.vmem [resolvable:$true] %s1144
          %1147 = dma.vmem_to_hbm [thread:$0]  %s1145, 256, %s1142, %s1128
        $region40: #{tpu_custom_call.1} parent=31 // pred_fallthru
          _
      $region32: #{tpu_custom_call.1} parent=5 // pred_fallthru
        _
      %p1148 = scmp.le.s32.totalorder 2, %s22
      // Predicated region
      $region41: #{tpu_custom_call.1} parent=5 // pred_check
        %p1149 = pneg %p1148
      $region42: #{tpu_custom_call.1} parent=5 // pred_check_branch
        %1151 = sbr.rel (%p1149) target = $region44
      $region43: #{tpu_custom_call.1} parent=5 // pred_region
        %s1152 = ssub.s32 %s22, 2
        // Predicated region
        $region45: #{tpu_custom_call.1} parent=43 // pred_check
          %p1153 = pneg %p142
        $region46: #{tpu_custom_call.1} parent=43 // pred_check_branch
          %1155 = sbr.rel (%p1153) target = $region48
        $region47: #{tpu_custom_call.1} parent=43 // pred_region
          %s1156 = sand.u32 %s127, 1
          %s1157 = scalar_lea.sflag [#allocation6], %s1156
          %s1158 = sand.u32 %s127, 1
          %s1159 = smul.addr %s1158, 16
          %s1160 = scalar_lea.vmem [#allocation7], %s1159
          %1161 = dma.done %s1157, 256
        $region48: #{tpu_custom_call.1} parent=43 // pred_fallthru
          _
      $region44: #{tpu_custom_call.1} parent=5 // pred_fallthru
        _
    $region6: #{tpu_custom_call.1} parent=1 // loop_footer
      %s26 = sadd.s32 1, %s22
    $region7: #{tpu_custom_call.1} parent=1 // loop_footer_branch
      %21 = sbr.rel target = $region3
    $region8: #{tpu_custom_call.1} parent=1 // loop_exit
      _
    %1162 = vsyncpa [#allocation5], 1
    %s1163 = scalar_lea.sflag [#allocation5], 1
    %1164 = vsyncpa %s1163, 1
    %1165 = vsyncpa [#allocation6], 1
    %s1166 = scalar_lea.sflag [#allocation6], 1
    %1167 = vsyncpa %s1166, 1

</llo_original>
